<compile_context>
chip_gen: v7x
topology: tpu7x:2x2x1
jax: 0.10.0
libtpu: 0.0.40
codegen_flags: <defaults>
</compile_context>

<pallas_src>
import functools
import math

import numpy as np
import jax
import jax.numpy as jnp
from jax.experimental import pallas as pl
from jax.experimental.pallas import tpu as pltpu


# ----------------------------------------------------------------------------
# norm_layer group count (replicates the PyTorch helper)
# ----------------------------------------------------------------------------
def _factor(num):
    factors = []
    for i in range(1, int(math.sqrt(num)) + 1):
        if num % i == 0:
            factors.append(i)
            t = num // i
            if t != i:
                factors.append(t)
    return np.array(factors)


def _num_groups(channels):
    if channels % 32 == 0:
        return 32
    elif channels < 32:
        return channels
    else:
        f = _factor(channels)
        return int(f[np.argmin((f - 32) ** 2)])


def _group_matrix(channels, groups):
    # A[i, j] = 1.0 iff channels i and j belong to the same GroupNorm group.
    g = np.arange(channels) // (channels // groups)
    return jnp.asarray((g[:, None] == g[None, :]).astype(np.float32))


# ----------------------------------------------------------------------------
# in-kernel helpers (traced inside the Pallas kernels)
# ----------------------------------------------------------------------------
def _gn_silu(xc, gamma, beta, A, groups, eps):
    # xc: (C, HW) f32 channel-major; gamma/beta: (C, 1); A: (C, C) same-group
    # indicator.  Group stats via lane reductions + the indicator matrix (no
    # cross-lane reshape of the channel axis).  All element-wise math in f32.
    C, HW = xc.shape
    inv_cnt = 1.0 / ((C // groups) * HW)
    csum = jnp.sum(xc, axis=1, keepdims=True)                          # (C, 1)
    mu = jnp.sum(A * jnp.transpose(csum), axis=1, keepdims=True) * inv_cnt
    d = xc - mu
    vsum = jnp.sum(d * d, axis=1, keepdims=True)
    var = jnp.sum(A * jnp.transpose(vsum), axis=1, keepdims=True) * inv_cnt
    y = d * (gamma * jax.lax.rsqrt(var + eps)) + beta
    return y * jax.nn.sigmoid(y)                                       # SiLU


def _conv3x3_im2col(y_cm, pad_ref, w_ref, bias_row, H, W):
    # y_cm: (C, HW) f32 activations (already GN+SiLU'ed), channel-major.
    # pad_ref: VMEM (H+2, W+9, C) f32 halo scratch.  The interior is written at
    #   rows [1, H], cols [8, 8+W) so the only scratch *store* is sublane-
    #   aligned; rows 0/H+1 and cols 7 / 8+W stay zero and provide the halo.
    # w_ref: (9*C, Cout) im2col weights; bias_row: (1, Cout) f32.
    # Returns (HW, Cout) f32.
    C = y_cm.shape[0]
    HW = H * W
    pad_ref[...] = jnp.zeros_like(pad_ref)
    pad_ref[1:H + 1, 8:8 + W, :] = jnp.transpose(y_cm).reshape(H, W, C)
    taps = [pad_ref[dy:dy + H, 7 + dx:7 + dx + W, :].reshape(HW, C)
            for dy in range(3) for dx in range(3)]
    patch = jnp.concatenate(taps, axis=1)            # (HW, 9*C) single im2col
    acc = jnp.dot(patch.astype(w_ref.dtype), w_ref[...],
                  preferred_element_type=jnp.float32)
    return acc + bias_row


# ----------------------------------------------------------------------------
# Pallas kernels
# ----------------------------------------------------------------------------
def _block1_kernel(x_ref, g_ref, b_ref, A_ref, w_ref, cb_ref, h_ref, pad_ref,
                   *, H, W, groups, eps):
    # Fused: GroupNorm(in) -> SiLU -> Conv3x3 -> +bias, one batch element.
    xc = x_ref[0].astype(jnp.float32)                                # (Cin, HW)
    y = _gn_silu(xc, g_ref[...], b_ref[...], A_ref[...], groups, eps)
    acc = _conv3x3_im2col(y, pad_ref, w_ref, cb_ref[...], H, W)      # (HW, Cout)
    h_ref[0] = jnp.transpose(acc).astype(h_ref.dtype)                # lane-dense


def _block2_kernel(*refs, H, W, groups, eps, has_proj):
    # Fused: time-emb Linear(SiLU(t)) -> h+temb -> GroupNorm(out) -> SiLU ->
    # Conv3x3 -> +bias -> +shortcut (1x1 conv or identity), one batch element.
    if has_proj:
        (h_ref, x_ref, t_ref, tw_ref, tb_ref, g_ref, b_ref, A_ref,
         w_ref, cb_ref, sw_ref, sb_ref, o_ref, pad_ref) = refs
    else:
        (h_ref, x_ref, t_ref, tw_ref, tb_ref, g_ref, b_ref, A_ref,
         w_ref, cb_ref, o_ref, pad_ref) = refs

    # time embedding as a (Cout, 1) column: Linear(SiLU(t)) for this batch row
    tt = t_ref[...].astype(jnp.float32)                              # (1, Tc)
    tt = tt * jax.nn.sigmoid(tt)
    temb = jnp.sum(tw_ref[...].astype(jnp.float32) * tt, axis=1,
                   keepdims=True) + tb_ref[...]                      # (Cout, 1)

    hc = h_ref[0].astype(jnp.float32) + temb                         # (Cout, HW)
    y = _gn_silu(hc, g_ref[...], b_ref[...], A_ref[...], groups, eps)
    acc = _conv3x3_im2col(y, pad_ref, w_ref, cb_ref[...], H, W)      # (HW, Cout)
    out = jnp.transpose(acc)                                         # (Cout, HW)

    if has_proj:   # fused 1x1-conv shortcut
        sc = jnp.dot(sw_ref[...], x_ref[0].astype(sw_ref.dtype),
                     preferred_element_type=jnp.float32) + sb_ref[...]
    else:          # identity shortcut (Cin == Cout)
        sc = x_ref[0].astype(jnp.float32)
    o_ref[0] = (out + sc).astype(o_ref.dtype)


# ----------------------------------------------------------------------------
# pallas_call wrappers
# ----------------------------------------------------------------------------
def _block1_call(x_flat, gamma, beta, A, w_im2col, bias, *, H, W, groups,
                 out_dtype, eps=1e-5):
    N, Cin, HW = x_flat.shape
    Cout = w_im2col.shape[-1]
    return pl.pallas_call(
        functools.partial(_block1_kernel, H=H, W=W, groups=groups, eps=eps),
        out_shape=jax.ShapeDtypeStruct((N, Cout, HW), out_dtype),
        grid=(N,),
        in_specs=[
            pl.BlockSpec((1, Cin, HW), lambda n: (n, 0, 0)),    # x  (NCHW flat)
            pl.BlockSpec((Cin, 1), lambda n: (0, 0)),           # gn gamma
            pl.BlockSpec((Cin, 1), lambda n: (0, 0)),           # gn beta
            pl.BlockSpec((Cin, Cin), lambda n: (0, 0)),         # group matrix
            pl.BlockSpec((9 * Cin, Cout), lambda n: (0, 0)),    # im2col weights
            pl.BlockSpec((1, Cout), lambda n: (0, 0)),          # conv bias
        ],
        out_specs=pl.BlockSpec((1, Cout, HW), lambda n: (n, 0, 0)),
        scratch_shapes=[pltpu.VMEM((H + 2, W + 9, Cin), jnp.float32)],
        compiler_params=pltpu.CompilerParams(dimension_semantics=("parallel",)),
    )(x_flat, gamma, beta, A, w_im2col, bias)


def _block2_call(h, x_flat, t, p, *, H, W, groups, has_proj, eps=1e-5):
    N, Cout, HW = h.shape
    Cin = x_flat.shape[1]
    Tc = t.shape[1]
    in_specs = [
        pl.BlockSpec((1, Cout, HW), lambda n: (n, 0, 0)),       # h (from block1)
        pl.BlockSpec((1, Cin, HW), lambda n: (n, 0, 0)),        # x (shortcut)
        pl.BlockSpec((1, Tc), lambda n: (n, 0)),                # t row
        pl.BlockSpec((Cout, Tc), lambda n: (0, 0)),             # time W (torch)
        pl.BlockSpec((Cout, 1), lambda n: (0, 0)),              # time b
        pl.BlockSpec((Cout, 1), lambda n: (0, 0)),              # gn2 gamma
        pl.BlockSpec((Cout, 1), lambda n: (0, 0)),              # gn2 beta
        pl.BlockSpec((Cout, Cout), lambda n: (0, 0)),           # group matrix
        pl.BlockSpec((9 * Cout, Cout), lambda n: (0, 0)),       # conv2 weights
        pl.BlockSpec((1, Cout), lambda n: (0, 0)),              # conv2 bias
    ]
    args = [h, x_flat, t, p["time_w"], p["time_b"], p["gn2_g"], p["gn2_b"],
            p["A2"], p["conv2_w"], p["conv2_b"]]
    if has_proj:
        in_specs += [pl.BlockSpec((Cout, Cin), lambda n: (0, 0)),  # 1x1 W
                     pl.BlockSpec((Cout, 1), lambda n: (0, 0))]    # 1x1 bias
        args += [p["sc_w"], p["sc_b"]]
    return pl.pallas_call(
        functools.partial(_block2_kernel, H=H, W=W, groups=groups, eps=eps,
                          has_proj=has_proj),
        out_shape=jax.ShapeDtypeStruct((N, Cout, HW), jnp.float32),
        grid=(N,),
        in_specs=in_specs,
        out_specs=pl.BlockSpec((1, Cout, HW), lambda n: (n, 0, 0)),
        scratch_shapes=[pltpu.VMEM((H + 2, W + 9, Cout), jnp.float32)],
        compiler_params=pltpu.CompilerParams(dimension_semantics=("parallel",)),
    )(*args)


# ----------------------------------------------------------------------------
# ResidualBlock forward (Pallas) + parameter prep
# ----------------------------------------------------------------------------
def residual_block_forward(x_nchw, t, params, groups_in, groups_out):
    N, Cin, H, W = x_nchw.shape
    Cout = params["conv1_b"].shape[-1]
    x_flat = x_nchw.reshape(N, Cin, H * W)          # free reshape, stays NCHW
    h = _block1_call(x_flat, params["gn1_g"], params["gn1_b"], params["A1"],
                     params["conv1_w"], params["conv1_b"],
                     H=H, W=W, groups=groups_in,
                     out_dtype=params["conv1_w"].dtype)
    out = _block2_call(h, x_flat, t, params, H=H, W=W, groups=groups_out,
                       has_proj=(Cin != Cout))
    return out.reshape(N, Cout, H, W)               # free reshape back to NCHW
    # TODO(synk): for large H/W/C, add spatial row-tiling (with halo) and Cout
    # tiling as extra parallel grid axes; whole-image-per-step is fine here.


def prepare_params(raw, groups_in, groups_out, conv_dtype):
    Cout, Cin, _, _ = raw["conv1_w"].shape
    return {
        "gn1_g": raw["gn1_g"].reshape(Cin, 1),
        "gn1_b": raw["gn1_b"].reshape(Cin, 1),
        "A1": _group_matrix(Cin, groups_in),
        # im2col weights: row index = (ky*3 + kx) * Cin + ci
        "conv1_w": jnp.transpose(raw["conv1_w"], (2, 3, 1, 0))
                      .reshape(9 * Cin, Cout).astype(conv_dtype),
        "conv1_b": raw["conv1_b"].reshape(1, Cout),
        "time_w": raw["time_w"],                       # (Cout, Tc) torch layout
        "time_b": raw["time_b"].reshape(Cout, 1),
        "gn2_g": raw["gn2_g"].reshape(Cout, 1),
        "gn2_b": raw["gn2_b"].reshape(Cout, 1),
        "A2": _group_matrix(Cout, groups_out),
        "conv2_w": jnp.transpose(raw["conv2_w"], (2, 3, 1, 0))
                      .reshape(9 * Cout, Cout).astype(conv_dtype),
        "conv2_b": raw["conv2_b"].reshape(1, Cout),
        "sc_w": raw["sc_w"].reshape(Cout, Cin).astype(conv_dtype),
        "sc_b": raw["sc_b"].reshape(Cout, 1),
    }


# ----------------------------------------------------------------------------
# Pure-JAX reference (for correctness check)
# ----------------------------------------------------------------------------
def _ref_gn(x, gamma, beta, groups, eps=1e-5):
    N, C, H, W = x.shape
    xg = x.reshape(N, groups, -1)
    mean = xg.mean(-1, keepdims=True)
    var = ((xg - mean) ** 2).mean(-1, keepdims=True)
    xn = ((xg - mean) / jnp.sqrt(var + eps)).reshape(N, C, H, W)
    return xn * gamma[None, :, None, None] + beta[None, :, None, None]


def _ref_conv(x, w_oihw, b):
    y = jax.lax.conv_general_dilated(
        x, w_oihw, (1, 1), ((1, 1), (1, 1)),
        dimension_numbers=("NCHW", "OIHW", "NCHW"))
    return y + b[None, :, None, None]


def _silu(x):
    return x * jax.nn.sigmoid(x)


def reference_forward(x, t, raw, groups_in, groups_out, in_c, out_c):
    h = _ref_conv(_silu(_ref_gn(x, raw["gn1_g"], raw["gn1_b"], groups_in)),
                  raw["conv1_w"], raw["conv1_b"])
    h = h + (_silu(t) @ raw["time_w"].T + raw["time_b"])[:, :, None, None]
    h = _ref_conv(_silu(_ref_gn(h, raw["gn2_g"], raw["gn2_b"], groups_out)),
                  raw["conv2_w"], raw["conv2_b"])
    if in_c != out_c:
        sc = jax.lax.conv_general_dilated(
            x, raw["sc_w"], (1, 1), ((0, 0), (0, 0)),
            dimension_numbers=("NCHW", "OIHW", "NCHW")) + raw["sc_b"][None, :, None, None]
    else:
        sc = x
    return h + sc


# ----------------------------------------------------------------------------
# main
# ----------------------------------------------------------------------------
if __name__ == "__main__":
    N, Cin, Cout, Tc, H, W = 2, 4, 8, 16, 16, 16
    groups_in = _num_groups(Cin)     # 4
    groups_out = _num_groups(Cout)   # 8

    key = jax.random.PRNGKey(0)
    ks = jax.random.split(key, 12)

    raw = {
        "gn1_g": 1.0 + 0.1 * jax.random.normal(ks[0], (Cin,), jnp.float32),
        "gn1_b": 0.1 * jax.random.normal(ks[1], (Cin,), jnp.float32),
        "conv1_w": 0.2 * jax.random.normal(ks[2], (Cout, Cin, 3, 3), jnp.float32),
        "conv1_b": 0.1 * jax.random.normal(ks[3], (Cout,), jnp.float32),
        "time_w": 0.2 * jax.random.normal(ks[4], (Cout, Tc), jnp.float32),
        "time_b": 0.1 * jax.random.normal(ks[5], (Cout,), jnp.float32),
        "gn2_g": 1.0 + 0.1 * jax.random.normal(ks[6], (Cout,), jnp.float32),
        "gn2_b": 0.1 * jax.random.normal(ks[7], (Cout,), jnp.float32),
        "conv2_w": 0.2 * jax.random.normal(ks[8], (Cout, Cout, 3, 3), jnp.float32),
        "conv2_b": 0.1 * jax.random.normal(ks[9], (Cout,), jnp.float32),
        "sc_w": 0.2 * jax.random.normal(ks[10], (Cout, Cin, 1, 1), jnp.float32),
        "sc_b": 0.1 * jax.random.normal(ks[11], (Cout,), jnp.float32),
    }

    kx, kt = jax.random.split(jax.random.PRNGKey(42))
    x = jax.random.normal(kx, (N, Cin, H, W), jnp.float32)   # NCHW, like PyTorch
    t = jax.random.normal(kt, (N, Tc), jnp.float32)

    ref = jax.block_until_ready(
        reference_forward(x, t, raw, groups_in, groups_out, Cin, Cout))

    # 1) f32-matmul mode: tight correctness check against the pure-JAX reference.
    p32 = prepare_params(raw, groups_in, groups_out, jnp.float32)
    out32 = jax.block_until_ready(
        residual_block_forward(x, t, p32, groups_in, groups_out))
    assert out32.shape == (N, Cout, H, W)
    np.testing.assert_allclose(np.asarray(out32), np.asarray(ref),
                               rtol=1e-4, atol=1e-4)

    # 2) bf16-MXU mode (the performance configuration): operands are rounded to
    #    bfloat16 before the MXU (f32 accumulation), so only a sanity bound.
    pbf = prepare_params(raw, groups_in, groups_out, jnp.bfloat16)
    outbf = jax.block_until_ready(
        residual_block_forward(x, t, pbf, groups_in, groups_out))
    assert outbf.shape == (N, Cout, H, W)
    np.testing.assert_allclose(np.asarray(outbf), np.asarray(ref),
                               rtol=5e-2, atol=2.5e-1)

    print("KERNEL_OK")
</pallas_src>

<mosaic_0001>
module attributes {stable_mosaic.version = 11 : i64} {
  func.func @_block1_kernel(%arg0: i32, %arg1: memref<1x4x256xf32, #tpu.memory_space<vmem>>, %arg2: memref<4x1xf32, #tpu.memory_space<vmem>>, %arg3: memref<4x1xf32, #tpu.memory_space<vmem>>, %arg4: memref<4x4xf32, #tpu.memory_space<vmem>>, %arg5: memref<36x8xf32, #tpu.memory_space<vmem>>, %arg6: memref<1x8xf32, #tpu.memory_space<vmem>>, %arg7: memref<1x8x256xf32, #tpu.memory_space<vmem>>, %arg8: memref<18x25x4xf32, #tpu.memory_space<vmem>>) attributes {dimension_semantics = [#tpu.dimension_semantics<parallel>], iteration_bounds = array<i64: 2>, scalar_prefetch = 0 : i64, scratch_operands = 1 : i64, tpu.core_type = #tpu.core_type<tc>, window_params = [{transform_indices = @transform_0, window_bounds = array<i64: 1, 4, 256>}, {pipeline_mode = #tpu.pipeline_mode<synchronous>, transform_indices = @transform_1, window_bounds = array<i64: 4, 1>}, {pipeline_mode = #tpu.pipeline_mode<synchronous>, transform_indices = @transform_2, window_bounds = array<i64: 4, 1>}, {pipeline_mode = #tpu.pipeline_mode<synchronous>, transform_indices = @transform_3, window_bounds = array<i64: 4, 4>}, {pipeline_mode = #tpu.pipeline_mode<synchronous>, transform_indices = @transform_4, window_bounds = array<i64: 36, 8>}, {pipeline_mode = #tpu.pipeline_mode<synchronous>, transform_indices = @transform_5, window_bounds = array<i64: 1, 8>}, {transform_indices = @transform_6, window_bounds = array<i64: 1, 8, 256>}]} {
    %c0 = arith.constant 0 : index
    %c0_0 = arith.constant 0 : index
    %c0_1 = arith.constant 0 : index
    %0 = vector.load %arg1[%c0, %c0_0, %c0_1] : memref<1x4x256xf32, #tpu.memory_space<vmem>>, vector<1x4x256xf32>
    %1 = vector.shape_cast %0 : vector<1x4x256xf32> to vector<4x256xf32>
    %c0_2 = arith.constant 0 : index
    %c0_3 = arith.constant 0 : index
    %2 = vector.load %arg2[%c0_2, %c0_3] : memref<4x1xf32, #tpu.memory_space<vmem>>, vector<4x1xf32>
    %c0_4 = arith.constant 0 : index
    %c0_5 = arith.constant 0 : index
    %3 = vector.load %arg3[%c0_4, %c0_5] : memref<4x1xf32, #tpu.memory_space<vmem>>, vector<4x1xf32>
    %c0_6 = arith.constant 0 : index
    %c0_7 = arith.constant 0 : index
    %4 = vector.load %arg4[%c0_6, %c0_7] : memref<4x4xf32, #tpu.memory_space<vmem>>, vector<4x4xf32>
    %cst = arith.constant dense<0.000000e+00> : vector<4xf32>
    %5 = vector.multi_reduction <add>, %1, %cst [1] : vector<4x256xf32> to vector<4xf32>
    %6 = vector.shape_cast %5 : vector<4xf32> to vector<4x1xf32>
    %7 = tpu.transpose %6, [1, 0] : vector<4x1xf32> -> vector<1x4xf32>
    %8 = vector.broadcast %7 : vector<1x4xf32> to vector<4x4xf32>
    %9 = arith.mulf %4, %8 : vector<4x4xf32>
    %cst_8 = arith.constant dense<0.000000e+00> : vector<4xf32>
    %10 = vector.multi_reduction <add>, %9, %cst_8 [1] : vector<4x4xf32> to vector<4xf32>
    %11 = vector.shape_cast %10 : vector<4xf32> to vector<4x1xf32>
    %cst_9 = arith.constant 3.906250e-03 : f32
    %12 = vector.broadcast %cst_9 : f32 to vector<4x1xf32>
    %13 = arith.mulf %11, %12 : vector<4x1xf32>
    %14 = vector.broadcast %13 : vector<4x1xf32> to vector<4x256xf32>
    %15 = arith.subf %1, %14 : vector<4x256xf32>
    %16 = arith.mulf %15, %15 : vector<4x256xf32>
    %cst_10 = arith.constant dense<0.000000e+00> : vector<4xf32>
    %17 = vector.multi_reduction <add>, %16, %cst_10 [1] : vector<4x256xf32> to vector<4xf32>
    %18 = vector.shape_cast %17 : vector<4xf32> to vector<4x1xf32>
    %19 = tpu.transpose %18, [1, 0] : vector<4x1xf32> -> vector<1x4xf32>
    %20 = vector.broadcast %19 : vector<1x4xf32> to vector<4x4xf32>
    %21 = arith.mulf %4, %20 : vector<4x4xf32>
    %cst_11 = arith.constant dense<0.000000e+00> : vector<4xf32>
    %22 = vector.multi_reduction <add>, %21, %cst_11 [1] : vector<4x4xf32> to vector<4xf32>
    %23 = vector.shape_cast %22 : vector<4xf32> to vector<4x1xf32>
    %cst_12 = arith.constant 3.906250e-03 : f32
    %24 = vector.broadcast %cst_12 : f32 to vector<4x1xf32>
    %25 = arith.mulf %23, %24 : vector<4x1xf32>
    %cst_13 = arith.constant 9.99999974E-6 : f32
    %26 = vector.broadcast %cst_13 : f32 to vector<4x1xf32>
    %27 = arith.addf %25, %26 : vector<4x1xf32>
    %28 = math.rsqrt %27 : vector<4x1xf32>
    %29 = arith.mulf %2, %28 : vector<4x1xf32>
    %30 = vector.broadcast %29 : vector<4x1xf32> to vector<4x256xf32>
    %31 = arith.mulf %15, %30 : vector<4x256xf32>
    %32 = vector.broadcast %3 : vector<4x1xf32> to vector<4x256xf32>
    %33 = arith.addf %31, %32 : vector<4x256xf32>
    %34 = arith.negf %33 : vector<4x256xf32>
    %35 = math.exp %34 : vector<4x256xf32>
    %cst_14 = arith.constant 1.000000e+00 : f32
    %36 = vector.broadcast %cst_14 : f32 to vector<4x256xf32>
    %37 = arith.addf %36, %35 : vector<4x256xf32>
    %38 = arith.divf %36, %37 : vector<4x256xf32>
    %39 = arith.mulf %33, %38 : vector<4x256xf32>
    %c0_15 = arith.constant 0 : index
    %c0_16 = arith.constant 0 : index
    %40 = vector.load %arg6[%c0_15, %c0_16] : memref<1x8xf32, #tpu.memory_space<vmem>>, vector<1x8xf32>
    %cst_17 = arith.constant 0.000000e+00 : f32
    %41 = vector.broadcast %cst_17 : f32 to vector<18x25x4xf32>
    %c0_18 = arith.constant 0 : index
    %c0_19 = arith.constant 0 : index
    %c0_20 = arith.constant 0 : index
    %42 = vector.load %arg8[%c0_18, %c0_19, %c0_20] : memref<18x25x4xf32, #tpu.memory_space<vmem>>, vector<18x25x4xf32>
    tpu.vector_store %arg8[%c0_18, %c0_19, %c0_20], %41 {strides = array<i32>} : memref<18x25x4xf32, #tpu.memory_space<vmem>>, vector<18x25x4xf32>,
    %43 = tpu.transpose %39, [1, 0] : vector<4x256xf32> -> vector<256x4xf32>
    %44 = vector.shape_cast %43 : vector<256x4xf32> to vector<16x16x4xf32>
    %c1 = arith.constant 1 : index
    %c8 = arith.constant 8 : index
    %c0_21 = arith.constant 0 : index
    %45 = vector.load %arg8[%c1, %c8, %c0_21] : memref<18x25x4xf32, #tpu.memory_space<vmem>>, vector<16x16x4xf32>
    tpu.vector_store %arg8[%c1, %c8, %c0_21], %44 {strides = array<i32>} : memref<18x25x4xf32, #tpu.memory_space<vmem>>, vector<16x16x4xf32>,
    %c0_22 = arith.constant 0 : index
    %c7 = arith.constant 7 : index
    %c0_23 = arith.constant 0 : index
    %46 = vector.load %arg8[%c0_22, %c7, %c0_23] : memref<18x25x4xf32, #tpu.memory_space<vmem>>, vector<16x16x4xf32>
    %47 = vector.shape_cast %46 : vector<16x16x4xf32> to vector<256x4xf32>
    %c0_24 = arith.constant 0 : index
    %c8_25 = arith.constant 8 : index
    %c0_26 = arith.constant 0 : index
    %48 = vector.load %arg8[%c0_24, %c8_25, %c0_26] : memref<18x25x4xf32, #tpu.memory_space<vmem>>, vector<16x16x4xf32>
    %49 = vector.shape_cast %48 : vector<16x16x4xf32> to vector<256x4xf32>
    %c0_27 = arith.constant 0 : index
    %c9 = arith.constant 9 : index
    %c0_28 = arith.constant 0 : index
    %50 = vector.load %arg8[%c0_27, %c9, %c0_28] : memref<18x25x4xf32, #tpu.memory_space<vmem>>, vector<16x16x4xf32>
    %51 = vector.shape_cast %50 : vector<16x16x4xf32> to vector<256x4xf32>
    %c1_29 = arith.constant 1 : index
    %c7_30 = arith.constant 7 : index
    %c0_31 = arith.constant 0 : index
    %52 = vector.load %arg8[%c1_29, %c7_30, %c0_31] : memref<18x25x4xf32, #tpu.memory_space<vmem>>, vector<16x16x4xf32>
    %53 = vector.shape_cast %52 : vector<16x16x4xf32> to vector<256x4xf32>
    %c1_32 = arith.constant 1 : index
    %c8_33 = arith.constant 8 : index
    %c0_34 = arith.constant 0 : index
    %54 = vector.load %arg8[%c1_32, %c8_33, %c0_34] : memref<18x25x4xf32, #tpu.memory_space<vmem>>, vector<16x16x4xf32>
    %55 = vector.shape_cast %54 : vector<16x16x4xf32> to vector<256x4xf32>
    %c1_35 = arith.constant 1 : index
    %c9_36 = arith.constant 9 : index
    %c0_37 = arith.constant 0 : index
    %56 = vector.load %arg8[%c1_35, %c9_36, %c0_37] : memref<18x25x4xf32, #tpu.memory_space<vmem>>, vector<16x16x4xf32>
    %57 = vector.shape_cast %56 : vector<16x16x4xf32> to vector<256x4xf32>
    %c2 = arith.constant 2 : index
    %c7_38 = arith.constant 7 : index
    %c0_39 = arith.constant 0 : index
    %58 = vector.load %arg8[%c2, %c7_38, %c0_39] : memref<18x25x4xf32, #tpu.memory_space<vmem>>, vector<16x16x4xf32>
    %59 = vector.shape_cast %58 : vector<16x16x4xf32> to vector<256x4xf32>
    %c2_40 = arith.constant 2 : index
    %c8_41 = arith.constant 8 : index
    %c0_42 = arith.constant 0 : index
    %60 = vector.load %arg8[%c2_40, %c8_41, %c0_42] : memref<18x25x4xf32, #tpu.memory_space<vmem>>, vector<16x16x4xf32>
    %61 = vector.shape_cast %60 : vector<16x16x4xf32> to vector<256x4xf32>
    %c2_43 = arith.constant 2 : index
    %c9_44 = arith.constant 9 : index
    %c0_45 = arith.constant 0 : index
    %62 = vector.load %arg8[%c2_43, %c9_44, %c0_45] : memref<18x25x4xf32, #tpu.memory_space<vmem>>, vector<16x16x4xf32>
    %63 = vector.shape_cast %62 : vector<16x16x4xf32> to vector<256x4xf32>
    %64 = tpu.concatenate %47, %49, %51, %53, %55, %57, %59, %61, %63 in 1 : vector<256x4xf32>, vector<256x4xf32>, vector<256x4xf32>, vector<256x4xf32>, vector<256x4xf32>, vector<256x4xf32>, vector<256x4xf32>, vector<256x4xf32>, vector<256x4xf32> -> vector<256x36xf32>
    %c0_46 = arith.constant 0 : index
    %c0_47 = arith.constant 0 : index
    %65 = vector.load %arg5[%c0_46, %c0_47] : memref<36x8xf32, #tpu.memory_space<vmem>>, vector<36x8xf32>
    %cst_48 = arith.constant dense<0.000000e+00> : vector<256x8xf32>
    %66 = tpu.matmul %64, %65, %cst_48 {dimension_numbers = #tpu.dot_dimension_numbers<[1], [0], [0], [1], [0, 0, 1, 1], [], []>} : vector<256x36xf32>, vector<36x8xf32>, vector<256x8xf32> -> vector<256x8xf32>
    %67 = vector.broadcast %40 : vector<1x8xf32> to vector<256x8xf32>
    %68 = arith.addf %66, %67 : vector<256x8xf32>
    %69 = tpu.transpose %68, [1, 0] : vector<256x8xf32> -> vector<8x256xf32>
    %c0_49 = arith.constant 0 : index
    %c0_50 = arith.constant 0 : index
    %c0_51 = arith.constant 0 : index
    %70 = vector.load %arg7[%c0_49, %c0_50, %c0_51] : memref<1x8x256xf32, #tpu.memory_space<vmem>>, vector<1x8x256xf32>
    %71 = vector.shape_cast %70 : vector<1x8x256xf32> to vector<8x256xf32>
    %72 = vector.shape_cast %69 : vector<8x256xf32> to vector<1x8x256xf32>
    tpu.vector_store %arg7[%c0_49, %c0_50, %c0_51], %72 {strides = array<i32>} : memref<1x8x256xf32, #tpu.memory_space<vmem>>, vector<1x8x256xf32>,
    return
  }
  func.func @transform_0(%arg0: i32) -> (i32, i32, i32) {
    %c0_i32 = arith.constant 0 : i32
    %c0_i32_0 = arith.constant 0 : i32
    %c0_i32_1 = arith.constant 0 : i32
    return %arg0, %c0_i32, %c0_i32_0 : i32, i32, i32
  }
  func.func @transform_1(%arg0: i32) -> (i32, i32) {
    %c0_i32 = arith.constant 0 : i32
    %c0_i32_0 = arith.constant 0 : i32
    %c0_i32_1 = arith.constant 0 : i32
    return %c0_i32, %c0_i32_0 : i32, i32
  }
  func.func @transform_2(%arg0: i32) -> (i32, i32) {
    %c0_i32 = arith.constant 0 : i32
    %c0_i32_0 = arith.constant 0 : i32
    %c0_i32_1 = arith.constant 0 : i32
    return %c0_i32, %c0_i32_0 : i32, i32
  }
  func.func @transform_3(%arg0: i32) -> (i32, i32) {
    %c0_i32 = arith.constant 0 : i32
    %c0_i32_0 = arith.constant 0 : i32
    %c0_i32_1 = arith.constant 0 : i32
    return %c0_i32, %c0_i32_0 : i32, i32
  }
  func.func @transform_4(%arg0: i32) -> (i32, i32) {
    %c0_i32 = arith.constant 0 : i32
    %c0_i32_0 = arith.constant 0 : i32
    %c0_i32_1 = arith.constant 0 : i32
    return %c0_i32, %c0_i32_0 : i32, i32
  }
  func.func @transform_5(%arg0: i32) -> (i32, i32) {
    %c0_i32 = arith.constant 0 : i32
    %c0_i32_0 = arith.constant 0 : i32
    %c0_i32_1 = arith.constant 0 : i32
    return %c0_i32, %c0_i32_0 : i32, i32
  }
  func.func @transform_6(%arg0: i32) -> (i32, i32, i32) {
    %c0_i32 = arith.constant 0 : i32
    %c0_i32_0 = arith.constant 0 : i32
    %c0_i32_1 = arith.constant 0 : i32
    return %arg0, %c0_i32, %c0_i32_0 : i32, i32, i32
  }
}

</mosaic_0001>

<llo_original>
// kernel: tpu_custom_call.1
$region0: #{tpu_custom_call.1}
  #allocation0 [shape = 'u32[]', space=smem, size = 0x4, offset = 0x4, fixed_abs, tag = 'smem constant byte address 0x4 - core index']
  #allocation1 [shape = 'u32[144,128]{1,0:T(1,128)}', space=vmem, size = 0x12000, scoped, tag = 'internal scratch']
  #allocation2 [shape = 'f32[18,25,4]{2,1,0:T(8,128)}', space=vmem, size = 0x48000, scoped, tag = 'scratch operand']
  %s0 = inlined_call_operand.vmem [shape: f32[2,4,256], index: 0, kind: input, shape index: {}]
  %s1 = inlined_call_operand.vmem [shape: f32[4,1], index: 1, kind: input, shape index: {}]
  %s2 = inlined_call_operand.vmem [shape: f32[4,1], index: 2, kind: input, shape index: {}]
  %s3 = inlined_call_operand.vmem [shape: f32[4,4], index: 3, kind: input, shape index: {}]
  %s4 = inlined_call_operand.vmem [shape: f32[36,8], index: 4, kind: input, shape index: {}]
  %s5 = inlined_call_operand.vmem [shape: f32[1,8], index: 5, kind: input, shape index: {}]
  %s6 = inlined_call_operand.hbm [shape: f32[2,8,256], index: 6, kind: output, shape index: {}]
  %s7 = sld [smem:[#allocation0]]
  $region57: #{tpu_custom_call.1} parent=0
    _
  %s9 = ssub.s32 1, %s7
  %s10 = scalar_select 0, %s9, %s7
  $region1: #{tpu_custom_call.1} parent=0
    #allocation3 [shape = 'u8[16384]{0}', space=vmem, size = 0x4000, scoped, tag = 'output window, operand 0']
    #allocation4 [shape = 's32[2]{0}', space=sflag, size = 0x8, scoped, tag = 'scoped memory for tpu_custom_call.1']
    %11 = vsyncpa [#allocation4], 0
    %s12 = scalar_lea.sflag [#allocation4], 1
    %13 = vsyncpa %s12, 0
    loop: start=0, step=1, limit=4
    $region2: #{tpu_custom_call.1} parent=1 // loop_pre_header
      _
    $region3: #{tpu_custom_call.1} parent=1 // loop_header
      %s15 = sphi 0, %s19
      %p16 = scmp.ge.s32.totalorder %s15, 4
      %s25 = sphi 0, %s27
      %s28 = sphi 0, %s25
      %s29 = sphi 0, %s28
      %s45 = sphi 0, %s29
      %s49 = sphi 0, %s49
      %s51 = sphi 0, %s49
      %s52 = sphi 0, %s51
      %s66 = sphi 0, %s52
      %s70 = sphi 0, %s70
      %s72 = sphi 0, %s70
      %s73 = sphi 0, %s72
      %s87 = sphi 0, %s73
      %s91 = sphi 0, %s91
      %s93 = sphi 0, %s91
      %s94 = sphi 0, %s93
      %s108 = sphi 0, %s94
      %s112 = sphi 0, %s112
      %s114 = sphi 0, %s112
      %s115 = sphi 0, %s114
      %s129 = sphi 0, %s115
      %s133 = sphi 0, %s133
      %s135 = sphi 0, %s133
      %s136 = sphi 0, %s135
      %s150 = sphi 0, %s136
      %s156 = sphi 0, %s158
      %s159 = sphi 0, %s156
      %s160 = sphi 0, %s159
      %s176 = sphi 0, %s160
    $region4: #{tpu_custom_call.1} parent=1 // loop_header_branch
      %18 = sbr.rel (%p16) target = $region8
    $region5: #{tpu_custom_call.1} parent=1 // loop_body
      %s20 = ssub.s32 %s15, 1
      %s21 = ssub.s32 %s15, 2
      %s22 = sadd.s32 %s15, 1
      %s23 = ssub.s32 %s15, %s22
      %p24 = scmp.eq.s32.totalorder %s23, 0
      %s26 = sadd.s32 %s25, 1
      %s27 = scalar_select %p24, %s25, %s26
      %p30 = pneg %p24
      %p31 = scmp.eq.s32.totalorder %s15, 1
      %p32 = por %p30, %p31
      %p33 = scmp.ne.s32.totalorder %s25, %s28
      %p34 = scmp.eq.s32.totalorder %s15, 0
      %p35 = por %p33, %p34
      %p36 = scmp.ne.s32.totalorder %s25, %s28
      %p37 = scmp.eq.s32.totalorder %s20, 1
      %p38 = por %p36, %p37
      %p39 = scmp.ne.s32.totalorder %s28, %s29
      %p40 = scmp.eq.s32.totalorder %s20, 0
      %p41 = por %p39, %p40
      %p42 = scmp.ne.s32.totalorder %s28, %s29
      %p43 = scmp.eq.s32.totalorder %s21, 1
      %p44 = por %p42, %p43
      %p46 = scmp.ne.s32.totalorder %s29, %s45
      %p47 = scmp.eq.s32.totalorder %s21, 0
      %p48 = por %p46, %p47
      %s50 = sadd.s32 %s49, 1
      %p53 = scmp.eq.s32.totalorder %s15, 1
      %p54 = scmp.ne.s32.totalorder %s49, %s51
      %p55 = scmp.eq.s32.totalorder %s15, 0
      %p56 = por %p54, %p55
      %p57 = scmp.ne.s32.totalorder %s49, %s51
      %p58 = scmp.eq.s32.totalorder %s20, 1
      %p59 = por %p57, %p58
      %p60 = scmp.ne.s32.totalorder %s51, %s52
      %p61 = scmp.eq.s32.totalorder %s20, 0
      %p62 = por %p60, %p61
      %p63 = scmp.ne.s32.totalorder %s51, %s52
      %p64 = scmp.eq.s32.totalorder %s21, 1
      %p65 = por %p63, %p64
      %p67 = scmp.ne.s32.totalorder %s52, %s66
      %p68 = scmp.eq.s32.totalorder %s21, 0
      %p69 = por %p67, %p68
      %s71 = sadd.s32 %s70, 1
      %p74 = scmp.eq.s32.totalorder %s15, 1
      %p75 = scmp.ne.s32.totalorder %s70, %s72
      %p76 = scmp.eq.s32.totalorder %s15, 0
      %p77 = por %p75, %p76
      %p78 = scmp.ne.s32.totalorder %s70, %s72
      %p79 = scmp.eq.s32.totalorder %s20, 1
      %p80 = por %p78, %p79
      %p81 = scmp.ne.s32.totalorder %s72, %s73
      %p82 = scmp.eq.s32.totalorder %s20, 0
      %p83 = por %p81, %p82
      %p84 = scmp.ne.s32.totalorder %s72, %s73
      %p85 = scmp.eq.s32.totalorder %s21, 1
      %p86 = por %p84, %p85
      %p88 = scmp.ne.s32.totalorder %s73, %s87
      %p89 = scmp.eq.s32.totalorder %s21, 0
      %p90 = por %p88, %p89
      %s92 = sadd.s32 %s91, 1
      %p95 = scmp.eq.s32.totalorder %s15, 1
      %p96 = scmp.ne.s32.totalorder %s91, %s93
      %p97 = scmp.eq.s32.totalorder %s15, 0
      %p98 = por %p96, %p97
      %p99 = scmp.ne.s32.totalorder %s91, %s93
      %p100 = scmp.eq.s32.totalorder %s20, 1
      %p101 = por %p99, %p100
      %p102 = scmp.ne.s32.totalorder %s93, %s94
      %p103 = scmp.eq.s32.totalorder %s20, 0
      %p104 = por %p102, %p103
      %p105 = scmp.ne.s32.totalorder %s93, %s94
      %p106 = scmp.eq.s32.totalorder %s21, 1
      %p107 = por %p105, %p106
      %p109 = scmp.ne.s32.totalorder %s94, %s108
      %p110 = scmp.eq.s32.totalorder %s21, 0
      %p111 = por %p109, %p110
      %s113 = sadd.s32 %s112, 1
      %p116 = scmp.eq.s32.totalorder %s15, 1
      %p117 = scmp.ne.s32.totalorder %s112, %s114
      %p118 = scmp.eq.s32.totalorder %s15, 0
      %p119 = por %p117, %p118
      %p120 = scmp.ne.s32.totalorder %s112, %s114
      %p121 = scmp.eq.s32.totalorder %s20, 1
      %p122 = por %p120, %p121
      %p123 = scmp.ne.s32.totalorder %s114, %s115
      %p124 = scmp.eq.s32.totalorder %s20, 0
      %p125 = por %p123, %p124
      %p126 = scmp.ne.s32.totalorder %s114, %s115
      %p127 = scmp.eq.s32.totalorder %s21, 1
      %p128 = por %p126, %p127
      %p130 = scmp.ne.s32.totalorder %s115, %s129
      %p131 = scmp.eq.s32.totalorder %s21, 0
      %p132 = por %p130, %p131
      %s134 = sadd.s32 %s133, 1
      %p137 = scmp.eq.s32.totalorder %s15, 1
      %p138 = scmp.ne.s32.totalorder %s133, %s135
      %p139 = scmp.eq.s32.totalorder %s15, 0
      %p140 = por %p138, %p139
      %p141 = scmp.ne.s32.totalorder %s133, %s135
      %p142 = scmp.eq.s32.totalorder %s20, 1
      %p143 = por %p141, %p142
      %p144 = scmp.ne.s32.totalorder %s135, %s136
      %p145 = scmp.eq.s32.totalorder %s20, 0
      %p146 = por %p144, %p145
      %p147 = scmp.ne.s32.totalorder %s135, %s136
      %p148 = scmp.eq.s32.totalorder %s21, 1
      %p149 = por %p147, %p148
      %p151 = scmp.ne.s32.totalorder %s136, %s150
      %p152 = scmp.eq.s32.totalorder %s21, 0
      %p153 = por %p151, %p152
      %s154 = ssub.s32 %s15, %s22
      %p155 = scmp.eq.s32.totalorder %s154, 0
      %s157 = sadd.s32 %s156, 1
      %s158 = scalar_select %p155, %s156, %s157
      %p161 = pneg %p155
      %p162 = scmp.eq.s32.totalorder %s15, 1
      %p163 = por %p161, %p162
      %p164 = scmp.ne.s32.totalorder %s156, %s159
      %p165 = scmp.eq.s32.totalorder %s15, 0
      %p166 = por %p164, %p165
      %p167 = scmp.ne.s32.totalorder %s156, %s159
      %p168 = scmp.eq.s32.totalorder %s20, 1
      %p169 = por %p167, %p168
      %p170 = scmp.ne.s32.totalorder %s159, %s160
      %p171 = scmp.eq.s32.totalorder %s20, 0
      %p172 = por %p170, %p171
      %p173 = scmp.ne.s32.totalorder %s159, %s160
      %p174 = scmp.eq.s32.totalorder %s21, 1
      %p175 = por %p173, %p174
      %p177 = scmp.ne.s32.totalorder %s160, %s176
      %p178 = scmp.eq.s32.totalorder %s21, 0
      %p179 = por %p177, %p178
      %p180 = scmp.le.s32.totalorder 1, %s15
      %p181 = scmp.lt.s32.totalorder %s15, 3
      %p182 = pnand %p180, %p181
      %p183 = pneg %p182
      // Predicated region
      $region9: #{tpu_custom_call.1} parent=5 // pred_check
        _
      $region10: #{tpu_custom_call.1} parent=5 // pred_check_branch
        %185 = sbr.rel (%p182) target = $region12
      $region11: #{tpu_custom_call.1} parent=5 // pred_region
        %s186 = ssub.s32 %s15, 1
        // Predicated region
        $region13: #{tpu_custom_call.1} parent=11 // pred_check
          %p187 = pneg %p62
        $region14: #{tpu_custom_call.1} parent=11 // pred_check_branch
          %189 = sbr.rel (%p187) target = $region16
        $region15: #{tpu_custom_call.1} parent=11 // pred_region
          _
        $region16: #{tpu_custom_call.1} parent=11 // pred_fallthru
          _
        // Predicated region
        $region17: #{tpu_custom_call.1} parent=11 // pred_check
          %p190 = pneg %p83
        $region18: #{tpu_custom_call.1} parent=11 // pred_check_branch
          %192 = sbr.rel (%p190) target = $region20
        $region19: #{tpu_custom_call.1} parent=11 // pred_region
          _
        $region20: #{tpu_custom_call.1} parent=11 // pred_fallthru
          _
        // Predicated region
        $region21: #{tpu_custom_call.1} parent=11 // pred_check
          %p193 = pneg %p104
        $region22: #{tpu_custom_call.1} parent=11 // pred_check_branch
          %195 = sbr.rel (%p193) target = $region24
        $region23: #{tpu_custom_call.1} parent=11 // pred_region
          _
        $region24: #{tpu_custom_call.1} parent=11 // pred_fallthru
          _
        // Predicated region
        $region25: #{tpu_custom_call.1} parent=11 // pred_check
          %p196 = pneg %p125
        $region26: #{tpu_custom_call.1} parent=11 // pred_check_branch
          %198 = sbr.rel (%p196) target = $region28
        $region27: #{tpu_custom_call.1} parent=11 // pred_region
          _
        $region28: #{tpu_custom_call.1} parent=11 // pred_fallthru
          _
        // Predicated region
        $region29: #{tpu_custom_call.1} parent=11 // pred_check
          %p199 = pneg %p146
        $region30: #{tpu_custom_call.1} parent=11 // pred_check_branch
          %201 = sbr.rel (%p199) target = $region32
        $region31: #{tpu_custom_call.1} parent=11 // pred_region
          _
        $region32: #{tpu_custom_call.1} parent=11 // pred_fallthru
          _
      $region12: #{tpu_custom_call.1} parent=5 // pred_fallthru
        _
      %p202 = scmp.lt.s32.totalorder %s15, 2
      // Predicated region
      $region33: #{tpu_custom_call.1} parent=5 // pred_check
        %p203 = pneg %p202
      $region34: #{tpu_custom_call.1} parent=5 // pred_check_branch
        %205 = sbr.rel (%p203) target = $region36
      $region35: #{tpu_custom_call.1} parent=5 // pred_region
        // Predicated region
        $region37: #{tpu_custom_call.1} parent=35 // pred_check
          %p206 = pneg %p35
        $region38: #{tpu_custom_call.1} parent=35 // pred_check_branch
          %208 = sbr.rel (%p206) target = $region40
        $region39: #{tpu_custom_call.1} parent=35 // pred_region
          %p209 = scmp.lt.s32.totalorder %s15, 1
          %s210 = scalar_select %p209, %s15, 1
          %s211 = smul.addr %s210, 2
          %s212 = smul.addr %s211, 4
          %s213 = scalar_lea.vmem %s0, %s212
        $region40: #{tpu_custom_call.1} parent=35 // pred_fallthru
          _
      $region36: #{tpu_custom_call.1} parent=5 // pred_fallthru
        _
      %p214 = scmp.le.s32.totalorder 1, %s15
      %p215 = scmp.lt.s32.totalorder %s15, 3
      %p216 = pnand %p214, %p215
      %p217 = pneg %p216
      // Predicated region
      $region41: #{tpu_custom_call.1} parent=5 // pred_check
        _
      $region42: #{tpu_custom_call.1} parent=5 // pred_check_branch
        %219 = sbr.rel (%p216) target = $region44
      $region43: #{tpu_custom_call.1} parent=5 // pred_region
        %s220 = ssub.s32 %s15, 1
        %p221 = scmp.lt.s32.totalorder %s20, 1
        %s222 = scalar_select %p221, %s20, 1
        %s223 = smul.addr %s222, 2
        %s224 = smul.addr %s223, 4
        %s225 = scalar_lea.vmem %s0, %s224
        %p226 = pneg %p41
        %p227 = pneg %p38
        %p228 = pneg %p62
        %p229 = pneg %p59
        %p230 = pneg %p83
        %p231 = pneg %p80
        %p232 = pneg %p104
        %p233 = pneg %p101
        %p234 = pneg %p125
        %p235 = pneg %p122
        %p236 = pneg %p146
        %p237 = pneg %p143
        %p238 = pneg %p172
        %p239 = pneg %p169
        %s240 = sand.u32 %s159, 1
        %s241 = scalar_lea.sflag [#allocation4], %s240
        %s242 = sand.u32 %s159, 1
        %s243 = smul.addr %s242, 16
        %s244 = scalar_lea.vmem [#allocation3], %s243
        %p245 = scmp.lt.s32.totalorder %s20, 1
        %s246 = scalar_select %p245, %s20, 1
        %s247 = smul.addr %s246, 2
        %s248 = smul.addr %s247, 4
        %s249 = scalar_lea.vmem %s0, %s248
        %v250 = vld [vmem:[%s249] sm:$0xff]
        %v251 = vld [vmem:[%s1] sm:$0xf]
        %v252 = vld [vmem:[%s2] sm:$0xf]
        %v253 = vld [vmem:[%s3] sm:$0xf]
        %v255 = vcombine.high %v250, %v250
        %vm257 = vcmask 1043456
        %v258 = vsel %vm257, %v250, 0.0
        %v259 = vsel %vm257, %v255, 0.0
        %v260 = vadd.f32 %v258, %v259
        %261 = vadd.xlane.f32.xlu0 %v260
        %v262 = vpop.xlane.xlu0 %261
        %263 = vxpose.xlu0.b32.start [1/16] %v262, 128
        %264 = vxpose.xlu0.b32.cont [2/16] 0.0, 128
        %265 = vxpose.xlu0.b32.cont [3/16] 0.0, 128
        %266 = vxpose.xlu0.b32.cont [4/16] 0.0, 128
        %267 = vxpose.xlu0.b32.cont [5/16] 0.0, 128
        %268 = vxpose.xlu0.b32.cont [6/16] 0.0, 128
        %269 = vxpose.xlu0.b32.cont [7/16] 0.0, 128
        %270 = vxpose.xlu0.b32.cont [8/16] 0.0, 128
        %271 = vxpose.xlu0.b32.cont [9/16] 0.0, 128
        %272 = vxpose.xlu0.b32.cont [10/16] 0.0, 128
        %273 = vxpose.xlu0.b32.cont [11/16] 0.0, 128
        %274 = vxpose.xlu0.b32.cont [12/16] 0.0, 128
        %275 = vxpose.xlu0.b32.cont [13/16] 0.0, 128
        %276 = vxpose.xlu0.b32.cont [14/16] 0.0, 128
        %277 = vxpose.xlu0.b32.cont [15/16] 0.0, 128
        %278 = vxpose.xlu0.b32.end [16/16] 0.0, 128
        %v279 = vpop.trf.xlu0
        %v280 = vpop.trf.xlu0
        %v281 = vpop.trf.xlu0
        %v282 = vpop.trf.xlu0
        %v283 = vpop.trf.xlu0
        %v284 = vpop.trf.xlu0
        %v285 = vpop.trf.xlu0
        %v286 = vpop.trf.xlu0
        %v287 = vpop.trf.xlu0
        %v288 = vpop.trf.xlu0
        %v289 = vpop.trf.xlu0
        %v290 = vpop.trf.xlu0
        %v291 = vpop.trf.xlu0
        %v292 = vpop.trf.xlu0
        %v293 = vpop.trf.xlu0
        %v294 = vpop.trf.xlu0
        %v295 = vlaneseq
        %v296 = vshrl.u32 %v295, 7
        %v297 = vsub.s32 0, %v296
        %v298 = vrot.slane %v279, %v297
        %v299 = vmul.f32 %v253, %v298
        %vm300 = vcmask 27648
        %v301 = vsel %vm300, %v299, 0.0
        %302 = vadd.xlane.f32.xlu0 %v301
        %v303 = vpop.xlane.xlu0 %302
        %v304 = vmul.f32 %v303, 0.00390625
        %v307 = vunpack.c.l.s4 839922192
        %v308 = vunpack.c.0.s8 %v307
        %v309 = vlaneseq
        %v310 = vshrl.u32 %v309, 7
        %v311 = vsub.s32 %v308, %v310
        %v312 = vrot.slane %v304, %v311
        %v314 = vsub.f32 %v250, %v312
        %v315 = vmul.f32 %v314, %v314
        %v317 = vcombine.high %v315, %v315
        %v319 = vsel %vm257, %v315, 0.0
        %v320 = vsel %vm257, %v317, 0.0
        %v321 = vadd.f32 %v319, %v320
        %322 = vadd.xlane.f32.xlu0 %v321
        %v323 = vpop.xlane.xlu0 %322
        %324 = vxpose.xlu0.b32.start [1/16] %v323, 128
        %325 = vxpose.xlu0.b32.cont [2/16] 0.0, 128
        %326 = vxpose.xlu0.b32.cont [3/16] 0.0, 128
        %327 = vxpose.xlu0.b32.cont [4/16] 0.0, 128
        %328 = vxpose.xlu0.b32.cont [5/16] 0.0, 128
        %329 = vxpose.xlu0.b32.cont [6/16] 0.0, 128
        %330 = vxpose.xlu0.b32.cont [7/16] 0.0, 128
        %331 = vxpose.xlu0.b32.cont [8/16] 0.0, 128
        %332 = vxpose.xlu0.b32.cont [9/16] 0.0, 128
        %333 = vxpose.xlu0.b32.cont [10/16] 0.0, 128
        %334 = vxpose.xlu0.b32.cont [11/16] 0.0, 128
        %335 = vxpose.xlu0.b32.cont [12/16] 0.0, 128
        %336 = vxpose.xlu0.b32.cont [13/16] 0.0, 128
        %337 = vxpose.xlu0.b32.cont [14/16] 0.0, 128
        %338 = vxpose.xlu0.b32.cont [15/16] 0.0, 128
        %339 = vxpose.xlu0.b32.end [16/16] 0.0, 128
        %v340 = vpop.trf.xlu0
        %v341 = vpop.trf.xlu0
        %v342 = vpop.trf.xlu0
        %v343 = vpop.trf.xlu0
        %v344 = vpop.trf.xlu0
        %v345 = vpop.trf.xlu0
        %v346 = vpop.trf.xlu0
        %v347 = vpop.trf.xlu0
        %v348 = vpop.trf.xlu0
        %v349 = vpop.trf.xlu0
        %v350 = vpop.trf.xlu0
        %v351 = vpop.trf.xlu0
        %v352 = vpop.trf.xlu0
        %v353 = vpop.trf.xlu0
        %v354 = vpop.trf.xlu0
        %v355 = vpop.trf.xlu0
        %v356 = vlaneseq
        %v357 = vshrl.u32 %v356, 7
        %v358 = vsub.s32 0, %v357
        %v359 = vrot.slane %v340, %v358
        %v360 = vmul.f32 %v253, %v359
        %v361 = vsel %vm300, %v360, 0.0
        %362 = vadd.xlane.f32.xlu0 %v361
        %v363 = vpop.xlane.xlu0 %362
        %v364 = vmul.f32 %v363, 0.00390625
        %v365 = vadd.f32 %v364, 1e-05
        %v366 = vrsqrt.pop %v365
        %v367 = vmul.f32 %v251, %v366
        %369 = vset.pattern.permute.xlu0 0
        %370 = vperm.xlu0 %369, %v367
        %v371 = vpop.permute.xlu0 %370
        %v373 = vunpack.c.l.s4 839922192
        %v374 = vunpack.c.0.s8 %v373
        %v375 = vlaneseq
        %v376 = vshrl.u32 %v375, 7
        %v377 = vsub.s32 %v374, %v376
        %v378 = vrot.slane %v371, %v377
        %v380 = vmul.f32 %v314, %v378
        %382 = vset.pattern.permute.xlu0 0
        %383 = vperm.xlu0 %382, %v252
        %v384 = vpop.permute.xlu0 %383
        %v386 = vunpack.c.l.s4 839922192
        %v387 = vunpack.c.0.s8 %v386
        %v388 = vlaneseq
        %v389 = vshrl.u32 %v388, 7
        %v390 = vsub.s32 %v387, %v389
        %v391 = vrot.slane %v384, %v390
        %v393 = vadd.f32 %v380, %v391
        %v394 = vxor.u32 %v393, 2147483648
        %v395 = vmul.f32 %v394, 1.442695
        %v396 = vpow.pop %v395
        %v397 = vadd.f32 %v396, 1.0
        %v398 = vrcp.pop %v397
        %v399 = vmul.f32 1.0, %v398
        %v400 = vmul.f32 %v393, %v399
        %v401 = vld [vmem:[%s5] sm:$0x1]
        %vm402 = vcmask 31744
        %403 = vst.msk [vmem:[#allocation2] sm:$0xff] %vm402, 0.0
        %404 = vst.msk [vmem:[#allocation2 + $0x8] sm:$0xff] %vm402, 0.0
        %405 = vst.msk [vmem:[#allocation2 + $0x10] sm:$0xff] %vm402, 0.0
        %vm406 = vcmask 24576
        %407 = vst.msk [vmem:[#allocation2 + $0x18] sm:$0x1] %vm406, 0.0
        %408 = vst.msk [vmem:[#allocation2 + $0x20] sm:$0xff] %vm402, 0.0
        %409 = vst.msk [vmem:[#allocation2 + $0x28] sm:$0xff] %vm402, 0.0
        %410 = vst.msk [vmem:[#allocation2 + $0x30] sm:$0xff] %vm402, 0.0
        %411 = vst.msk [vmem:[#allocation2 + $0x38] sm:$0x1] %vm406, 0.0
        %412 = vst.msk [vmem:[#allocation2 + $0x40] sm:$0xff] %vm402, 0.0
        %413 = vst.msk [vmem:[#allocation2 + $0x48] sm:$0xff] %vm402, 0.0
        %414 = vst.msk [vmem:[#allocation2 + $0x50] sm:$0xff] %vm402, 0.0
        %415 = vst.msk [vmem:[#allocation2 + $0x58] sm:$0x1] %vm406, 0.0
        %416 = vst.msk [vmem:[#allocation2 + $0x60] sm:$0xff] %vm402, 0.0
        %417 = vst.msk [vmem:[#allocation2 + $0x68] sm:$0xff] %vm402, 0.0
        %418 = vst.msk [vmem:[#allocation2 + $0x70] sm:$0xff] %vm402, 0.0
        %419 = vst.msk [vmem:[#allocation2 + $0x78] sm:$0x1] %vm406, 0.0
        %420 = vst.msk [vmem:[#allocation2 + $0x80] sm:$0xff] %vm402, 0.0
        %421 = vst.msk [vmem:[#allocation2 + $0x88] sm:$0xff] %vm402, 0.0
        %422 = vst.msk [vmem:[#allocation2 + $0x90] sm:$0xff] %vm402, 0.0
        %423 = vst.msk [vmem:[#allocation2 + $0x98] sm:$0x1] %vm406, 0.0
        %424 = vst.msk [vmem:[#allocation2 + $0xa0] sm:$0xff] %vm402, 0.0
        %425 = vst.msk [vmem:[#allocation2 + $0xa8] sm:$0xff] %vm402, 0.0
        %426 = vst.msk [vmem:[#allocation2 + $0xb0] sm:$0xff] %vm402, 0.0
        %427 = vst.msk [vmem:[#allocation2 + $0xb8] sm:$0x1] %vm406, 0.0
        %428 = vst.msk [vmem:[#allocation2 + $0xc0] sm:$0xff] %vm402, 0.0
        %429 = vst.msk [vmem:[#allocation2 + $0xc8] sm:$0xff] %vm402, 0.0
        %430 = vst.msk [vmem:[#allocation2 + $0xd0] sm:$0xff] %vm402, 0.0
        %431 = vst.msk [vmem:[#allocation2 + $0xd8] sm:$0x1] %vm406, 0.0
        %432 = vst.msk [vmem:[#allocation2 + $0xe0] sm:$0xff] %vm402, 0.0
        %433 = vst.msk [vmem:[#allocation2 + $0xe8] sm:$0xff] %vm402, 0.0
        %434 = vst.msk [vmem:[#allocation2 + $0xf0] sm:$0xff] %vm402, 0.0
        %435 = vst.msk [vmem:[#allocation2 + $0xf8] sm:$0x1] %vm406, 0.0
        %436 = vst.msk [vmem:[#allocation2 + $0x100] sm:$0xff] %vm402, 0.0
        %437 = vst.msk [vmem:[#allocation2 + $0x108] sm:$0xff] %vm402, 0.0
        %438 = vst.msk [vmem:[#allocation2 + $0x110] sm:$0xff] %vm402, 0.0
        %439 = vst.msk [vmem:[#allocation2 + $0x118] sm:$0x1] %vm406, 0.0
        %440 = vst.msk [vmem:[#allocation2 + $0x120] sm:$0xff] %vm402, 0.0
        %441 = vst.msk [vmem:[#allocation2 + $0x128] sm:$0xff] %vm402, 0.0
        %442 = vst.msk [vmem:[#allocation2 + $0x130] sm:$0xff] %vm402, 0.0
        %443 = vst.msk [vmem:[#allocation2 + $0x138] sm:$0x1] %vm406, 0.0
        %444 = vst.msk [vmem:[#allocation2 + $0x140] sm:$0xff] %vm402, 0.0
        %445 = vst.msk [vmem:[#allocation2 + $0x148] sm:$0xff] %vm402, 0.0
        %446 = vst.msk [vmem:[#allocation2 + $0x150] sm:$0xff] %vm402, 0.0
        %447 = vst.msk [vmem:[#allocation2 + $0x158] sm:$0x1] %vm406, 0.0
        %448 = vst.msk [vmem:[#allocation2 + $0x160] sm:$0xff] %vm402, 0.0
        %449 = vst.msk [vmem:[#allocation2 + $0x168] sm:$0xff] %vm402, 0.0
        %450 = vst.msk [vmem:[#allocation2 + $0x170] sm:$0xff] %vm402, 0.0
        %451 = vst.msk [vmem:[#allocation2 + $0x178] sm:$0x1] %vm406, 0.0
        %452 = vst.msk [vmem:[#allocation2 + $0x180] sm:$0xff] %vm402, 0.0
        %453 = vst.msk [vmem:[#allocation2 + $0x188] sm:$0xff] %vm402, 0.0
        %454 = vst.msk [vmem:[#allocation2 + $0x190] sm:$0xff] %vm402, 0.0
        %455 = vst.msk [vmem:[#allocation2 + $0x198] sm:$0x1] %vm406, 0.0
        %456 = vst.msk [vmem:[#allocation2 + $0x1a0] sm:$0xff] %vm402, 0.0
        %457 = vst.msk [vmem:[#allocation2 + $0x1a8] sm:$0xff] %vm402, 0.0
        %458 = vst.msk [vmem:[#allocation2 + $0x1b0] sm:$0xff] %vm402, 0.0
        %459 = vst.msk [vmem:[#allocation2 + $0x1b8] sm:$0x1] %vm406, 0.0
        %460 = vst.msk [vmem:[#allocation2 + $0x1c0] sm:$0xff] %vm402, 0.0
        %461 = vst.msk [vmem:[#allocation2 + $0x1c8] sm:$0xff] %vm402, 0.0
        %462 = vst.msk [vmem:[#allocation2 + $0x1d0] sm:$0xff] %vm402, 0.0
        %463 = vst.msk [vmem:[#allocation2 + $0x1d8] sm:$0x1] %vm406, 0.0
        %464 = vst.msk [vmem:[#allocation2 + $0x1e0] sm:$0xff] %vm402, 0.0
        %465 = vst.msk [vmem:[#allocation2 + $0x1e8] sm:$0xff] %vm402, 0.0
        %466 = vst.msk [vmem:[#allocation2 + $0x1f0] sm:$0xff] %vm402, 0.0
        %467 = vst.msk [vmem:[#allocation2 + $0x1f8] sm:$0x1] %vm406, 0.0
        %468 = vst.msk [vmem:[#allocation2 + $0x200] sm:$0xff] %vm402, 0.0
        %469 = vst.msk [vmem:[#allocation2 + $0x208] sm:$0xff] %vm402, 0.0
        %470 = vst.msk [vmem:[#allocation2 + $0x210] sm:$0xff] %vm402, 0.0
        %471 = vst.msk [vmem:[#allocation2 + $0x218] sm:$0x1] %vm406, 0.0
        %472 = vst.msk [vmem:[#allocation2 + $0x220] sm:$0xff] %vm402, 0.0
        %473 = vst.msk [vmem:[#allocation2 + $0x228] sm:$0xff] %vm402, 0.0
        %474 = vst.msk [vmem:[#allocation2 + $0x230] sm:$0xff] %vm402, 0.0
        %475 = vst.msk [vmem:[#allocation2 + $0x238] sm:$0x1] %vm406, 0.0
        %v477 = vcombine.high %v400, %v400
        %479 = vxpose.xlu0.b32.start [1/16] %v400, 128
        %480 = vxpose.xlu0.b32.cont [2/16] 0.0, 128
        %481 = vxpose.xlu0.b32.cont [3/16] 0.0, 128
        %482 = vxpose.xlu0.b32.cont [4/16] 0.0, 128
        %483 = vxpose.xlu0.b32.cont [5/16] 0.0, 128
        %484 = vxpose.xlu0.b32.cont [6/16] 0.0, 128
        %485 = vxpose.xlu0.b32.cont [7/16] 0.0, 128
        %486 = vxpose.xlu0.b32.cont [8/16] 0.0, 128
        %487 = vxpose.xlu0.b32.cont [9/16] 0.0, 128
        %488 = vxpose.xlu0.b32.cont [10/16] 0.0, 128
        %489 = vxpose.xlu0.b32.cont [11/16] 0.0, 128
        %490 = vxpose.xlu0.b32.cont [12/16] 0.0, 128
        %491 = vxpose.xlu0.b32.cont [13/16] 0.0, 128
        %492 = vxpose.xlu0.b32.cont [14/16] 0.0, 128
        %493 = vxpose.xlu0.b32.cont [15/16] 0.0, 128
        %494 = vxpose.xlu0.b32.end [16/16] 0.0, 128
        %v495 = vpop.trf.xlu0
        %v496 = vpop.trf.xlu0
        %v497 = vpop.trf.xlu0
        %v498 = vpop.trf.xlu0
        %v499 = vpop.trf.xlu0
        %v500 = vpop.trf.xlu0
        %v501 = vpop.trf.xlu0
        %v502 = vpop.trf.xlu0
        %v503 = vpop.trf.xlu0
        %v504 = vpop.trf.xlu0
        %v505 = vpop.trf.xlu0
        %v506 = vpop.trf.xlu0
        %v507 = vpop.trf.xlu0
        %v508 = vpop.trf.xlu0
        %v509 = vpop.trf.xlu0
        %v510 = vpop.trf.xlu0
        %511 = vxpose.xlu0.b32.start [1/16] %v477, 128
        %512 = vxpose.xlu0.b32.cont [2/16] 0.0, 128
        %513 = vxpose.xlu0.b32.cont [3/16] 0.0, 128
        %514 = vxpose.xlu0.b32.cont [4/16] 0.0, 128
        %515 = vxpose.xlu0.b32.cont [5/16] 0.0, 128
        %516 = vxpose.xlu0.b32.cont [6/16] 0.0, 128
        %517 = vxpose.xlu0.b32.cont [7/16] 0.0, 128
        %518 = vxpose.xlu0.b32.cont [8/16] 0.0, 128
        %519 = vxpose.xlu0.b32.cont [9/16] 0.0, 128
        %520 = vxpose.xlu0.b32.cont [10/16] 0.0, 128
        %521 = vxpose.xlu0.b32.cont [11/16] 0.0, 128
        %522 = vxpose.xlu0.b32.cont [12/16] 0.0, 128
        %523 = vxpose.xlu0.b32.cont [13/16] 0.0, 128
        %524 = vxpose.xlu0.b32.cont [14/16] 0.0, 128
        %525 = vxpose.xlu0.b32.cont [15/16] 0.0, 128
        %526 = vxpose.xlu0.b32.end [16/16] 0.0, 128
        %v527 = vpop.trf.xlu0
        %v528 = vpop.trf.xlu0
        %v529 = vpop.trf.xlu0
        %v530 = vpop.trf.xlu0
        %v531 = vpop.trf.xlu0
        %v532 = vpop.trf.xlu0
        %v533 = vpop.trf.xlu0
        %v534 = vpop.trf.xlu0
        %v535 = vpop.trf.xlu0
        %v536 = vpop.trf.xlu0
        %v537 = vpop.trf.xlu0
        %v538 = vpop.trf.xlu0
        %v539 = vpop.trf.xlu0
        %v540 = vpop.trf.xlu0
        %v541 = vpop.trf.xlu0
        %v542 = vpop.trf.xlu0
        %s543 = scalar_lea.vmem [#allocation2], 32
        %544 = vst.msk [vmem:[%s543 + $0x8] sm:$0xff] %vm402, %v495
        %545 = vst.msk [vmem:[%s543 + $0x10] sm:$0xff] %vm402, %v496
        %546 = vst.msk [vmem:[%s543 + $0x28] sm:$0xff] %vm402, %v497
        %547 = vst.msk [vmem:[%s543 + $0x30] sm:$0xff] %vm402, %v498
        %548 = vst.msk [vmem:[%s543 + $0x48] sm:$0xff] %vm402, %v499
        %549 = vst.msk [vmem:[%s543 + $0x50] sm:$0xff] %vm402, %v500
        %550 = vst.msk [vmem:[%s543 + $0x68] sm:$0xff] %vm402, %v501
        %551 = vst.msk [vmem:[%s543 + $0x70] sm:$0xff] %vm402, %v502
        %552 = vst.msk [vmem:[%s543 + $0x88] sm:$0xff] %vm402, %v503
        %553 = vst.msk [vmem:[%s543 + $0x90] sm:$0xff] %vm402, %v504
        %554 = vst.msk [vmem:[%s543 + $0xa8] sm:$0xff] %vm402, %v505
        %555 = vst.msk [vmem:[%s543 + $0xb0] sm:$0xff] %vm402, %v506
        %556 = vst.msk [vmem:[%s543 + $0xc8] sm:$0xff] %vm402, %v507
        %557 = vst.msk [vmem:[%s543 + $0xd0] sm:$0xff] %vm402, %v508
        %558 = vst.msk [vmem:[%s543 + $0xe8] sm:$0xff] %vm402, %v509
        %559 = vst.msk [vmem:[%s543 + $0xf0] sm:$0xff] %vm402, %v510
        %560 = vst.msk [vmem:[%s543 + $0x108] sm:$0xff] %vm402, %v527
        %561 = vst.msk [vmem:[%s543 + $0x110] sm:$0xff] %vm402, %v528
        %562 = vst.msk [vmem:[%s543 + $0x128] sm:$0xff] %vm402, %v529
        %563 = vst.msk [vmem:[%s543 + $0x130] sm:$0xff] %vm402, %v530
        %564 = vst.msk [vmem:[%s543 + $0x148] sm:$0xff] %vm402, %v531
        %565 = vst.msk [vmem:[%s543 + $0x150] sm:$0xff] %vm402, %v532
        %566 = vst.msk [vmem:[%s543 + $0x168] sm:$0xff] %vm402, %v533
        %567 = vst.msk [vmem:[%s543 + $0x170] sm:$0xff] %vm402, %v534
        %568 = vst.msk [vmem:[%s543 + $0x188] sm:$0xff] %vm402, %v535
        %569 = vst.msk [vmem:[%s543 + $0x190] sm:$0xff] %vm402, %v536
        %570 = vst.msk [vmem:[%s543 + $0x1a8] sm:$0xff] %vm402, %v537
        %571 = vst.msk [vmem:[%s543 + $0x1b0] sm:$0xff] %vm402, %v538
        %572 = vst.msk [vmem:[%s543 + $0x1c8] sm:$0xff] %vm402, %v539
        %573 = vst.msk [vmem:[%s543 + $0x1d0] sm:$0xff] %vm402, %v540
        %574 = vst.msk [vmem:[%s543 + $0x1e8] sm:$0xff] %vm402, %v541
        %575 = vst.msk [vmem:[%s543 + $0x1f0] sm:$0xff] %vm402, %v542
        %v576 = vld [vmem:[#allocation2 + $0x7] sm:$0xff]
        %v577 = vld [vmem:[#allocation2 + $0xf] sm:$0xff]
        %v578 = vld [vmem:[#allocation2 + $0x27] sm:$0xff]
        %v579 = vld [vmem:[#allocation2 + $0x2f] sm:$0xff]
        %v580 = vld [vmem:[#allocation2 + $0x47] sm:$0xff]
        %v581 = vld [vmem:[#allocation2 + $0x4f] sm:$0xff]
        %v582 = vld [vmem:[#allocation2 + $0x67] sm:$0xff]
        %v583 = vld [vmem:[#allocation2 + $0x6f] sm:$0xff]
        %v584 = vld [vmem:[#allocation2 + $0x87] sm:$0xff]
        %v585 = vld [vmem:[#allocation2 + $0x8f] sm:$0xff]
        %v586 = vld [vmem:[#allocation2 + $0xa7] sm:$0xff]
        %v587 = vld [vmem:[#allocation2 + $0xaf] sm:$0xff]
        %v588 = vld [vmem:[#allocation2 + $0xc7] sm:$0xff]
        %v589 = vld [vmem:[#allocation2 + $0xcf] sm:$0xff]
        %v590 = vld [vmem:[#allocation2 + $0xe7] sm:$0xff]
        %v591 = vld [vmem:[#allocation2 + $0xef] sm:$0xff]
        %v592 = vld [vmem:[#allocation2 + $0x107] sm:$0xff]
        %v593 = vld [vmem:[#allocation2 + $0x10f] sm:$0xff]
        %v594 = vld [vmem:[#allocation2 + $0x127] sm:$0xff]
        %v595 = vld [vmem:[#allocation2 + $0x12f] sm:$0xff]
        %v596 = vld [vmem:[#allocation2 + $0x147] sm:$0xff]
        %v597 = vld [vmem:[#allocation2 + $0x14f] sm:$0xff]
        %v598 = vld [vmem:[#allocation2 + $0x167] sm:$0xff]
        %v599 = vld [vmem:[#allocation2 + $0x16f] sm:$0xff]
        %v600 = vld [vmem:[#allocation2 + $0x187] sm:$0xff]
        %v601 = vld [vmem:[#allocation2 + $0x18f] sm:$0xff]
        %v602 = vld [vmem:[#allocation2 + $0x1a7] sm:$0xff]
        %v603 = vld [vmem:[#allocation2 + $0x1af] sm:$0xff]
        %v604 = vld [vmem:[#allocation2 + $0x1c7] sm:$0xff]
        %v605 = vld [vmem:[#allocation2 + $0x1cf] sm:$0xff]
        %v606 = vld [vmem:[#allocation2 + $0x1e7] sm:$0xff]
        %v607 = vld [vmem:[#allocation2 + $0x1ef] sm:$0xff]
        %v608 = vld [vmem:[#allocation2 + $0x8] sm:$0xff]
        %v609 = vld [vmem:[#allocation2 + $0x10] sm:$0xff]
        %v610 = vld [vmem:[#allocation2 + $0x28] sm:$0xff]
        %v611 = vld [vmem:[#allocation2 + $0x30] sm:$0xff]
        %v612 = vld [vmem:[#allocation2 + $0x48] sm:$0xff]
        %v613 = vld [vmem:[#allocation2 + $0x50] sm:$0xff]
        %v614 = vld [vmem:[#allocation2 + $0x68] sm:$0xff]
        %v615 = vld [vmem:[#allocation2 + $0x70] sm:$0xff]
        %v616 = vld [vmem:[#allocation2 + $0x88] sm:$0xff]
        %v617 = vld [vmem:[#allocation2 + $0x90] sm:$0xff]
        %v618 = vld [vmem:[#allocation2 + $0xa8] sm:$0xff]
        %v619 = vld [vmem:[#allocation2 + $0xb0] sm:$0xff]
        %v620 = vld [vmem:[#allocation2 + $0xc8] sm:$0xff]
        %v621 = vld [vmem:[#allocation2 + $0xd0] sm:$0xff]
        %v622 = vld [vmem:[#allocation2 + $0xe8] sm:$0xff]
        %v623 = vld [vmem:[#allocation2 + $0xf0] sm:$0xff]
        %v624 = vld [vmem:[#allocation2 + $0x108] sm:$0xff]
        %v625 = vld [vmem:[#allocation2 + $0x110] sm:$0xff]
        %v626 = vld [vmem:[#allocation2 + $0x128] sm:$0xff]
        %v627 = vld [vmem:[#allocation2 + $0x130] sm:$0xff]
        %v628 = vld [vmem:[#allocation2 + $0x148] sm:$0xff]
        %v629 = vld [vmem:[#allocation2 + $0x150] sm:$0xff]
        %v630 = vld [vmem:[#allocation2 + $0x168] sm:$0xff]
        %v631 = vld [vmem:[#allocation2 + $0x170] sm:$0xff]
        %v632 = vld [vmem:[#allocation2 + $0x188] sm:$0xff]
        %v633 = vld [vmem:[#allocation2 + $0x190] sm:$0xff]
        %v634 = vld [vmem:[#allocation2 + $0x1a8] sm:$0xff]
        %v635 = vld [vmem:[#allocation2 + $0x1b0] sm:$0xff]
        %v636 = vld [vmem:[#allocation2 + $0x1c8] sm:$0xff]
        %v637 = vld [vmem:[#allocation2 + $0x1d0] sm:$0xff]
        %v638 = vld [vmem:[#allocation2 + $0x1e8] sm:$0xff]
        %v639 = vld [vmem:[#allocation2 + $0x1f0] sm:$0xff]
        %v640 = vld [vmem:[#allocation2 + $0x9] sm:$0xff]
        %v641 = vld [vmem:[#allocation2 + $0x11] sm:$0xff]
        %v642 = vld [vmem:[#allocation2 + $0x29] sm:$0xff]
        %v643 = vld [vmem:[#allocation2 + $0x31] sm:$0xff]
        %v644 = vld [vmem:[#allocation2 + $0x49] sm:$0xff]
        %v645 = vld [vmem:[#allocation2 + $0x51] sm:$0xff]
        %v646 = vld [vmem:[#allocation2 + $0x69] sm:$0xff]
        %v647 = vld [vmem:[#allocation2 + $0x71] sm:$0xff]
        %v648 = vld [vmem:[#allocation2 + $0x89] sm:$0xff]
        %v649 = vld [vmem:[#allocation2 + $0x91] sm:$0xff]
        %v650 = vld [vmem:[#allocation2 + $0xa9] sm:$0xff]
        %v651 = vld [vmem:[#allocation2 + $0xb1] sm:$0xff]
        %v652 = vld [vmem:[#allocation2 + $0xc9] sm:$0xff]
        %v653 = vld [vmem:[#allocation2 + $0xd1] sm:$0xff]
        %v654 = vld [vmem:[#allocation2 + $0xe9] sm:$0xff]
        %v655 = vld [vmem:[#allocation2 + $0xf1] sm:$0xff]
        %v656 = vld [vmem:[#allocation2 + $0x109] sm:$0xff]
        %v657 = vld [vmem:[#allocation2 + $0x111] sm:$0xff]
        %v658 = vld [vmem:[#allocation2 + $0x129] sm:$0xff]
        %v659 = vld [vmem:[#allocation2 + $0x131] sm:$0xff]
        %v660 = vld [vmem:[#allocation2 + $0x149] sm:$0xff]
        %v661 = vld [vmem:[#allocation2 + $0x151] sm:$0xff]
        %v662 = vld [vmem:[#allocation2 + $0x169] sm:$0xff]
        %v663 = vld [vmem:[#allocation2 + $0x171] sm:$0xff]
        %v664 = vld [vmem:[#allocation2 + $0x189] sm:$0xff]
        %v665 = vld [vmem:[#allocation2 + $0x191] sm:$0xff]
        %v666 = vld [vmem:[#allocation2 + $0x1a9] sm:$0xff]
        %v667 = vld [vmem:[#allocation2 + $0x1b1] sm:$0xff]
        %v668 = vld [vmem:[#allocation2 + $0x1c9] sm:$0xff]
        %v669 = vld [vmem:[#allocation2 + $0x1d1] sm:$0xff]
        %v670 = vld [vmem:[#allocation2 + $0x1e9] sm:$0xff]
        %v671 = vld [vmem:[#allocation2 + $0x1f1] sm:$0xff]
        %v672 = vld [vmem:[%s543 + $0x7] sm:$0xff]
        %v673 = vld [vmem:[%s543 + $0xf] sm:$0xff]
        %v674 = vld [vmem:[%s543 + $0x27] sm:$0xff]
        %v675 = vld [vmem:[%s543 + $0x2f] sm:$0xff]
        %v676 = vld [vmem:[%s543 + $0x47] sm:$0xff]
        %v677 = vld [vmem:[%s543 + $0x4f] sm:$0xff]
        %v678 = vld [vmem:[%s543 + $0x67] sm:$0xff]
        %v679 = vld [vmem:[%s543 + $0x6f] sm:$0xff]
        %v680 = vld [vmem:[%s543 + $0x87] sm:$0xff]
        %v681 = vld [vmem:[%s543 + $0x8f] sm:$0xff]
        %v682 = vld [vmem:[%s543 + $0xa7] sm:$0xff]
        %v683 = vld [vmem:[%s543 + $0xaf] sm:$0xff]
        %v684 = vld [vmem:[%s543 + $0xc7] sm:$0xff]
        %v685 = vld [vmem:[%s543 + $0xcf] sm:$0xff]
        %v686 = vld [vmem:[%s543 + $0xe7] sm:$0xff]
        %v687 = vld [vmem:[%s543 + $0xef] sm:$0xff]
        %v688 = vld [vmem:[%s543 + $0x107] sm:$0xff]
        %v689 = vld [vmem:[%s543 + $0x10f] sm:$0xff]
        %v690 = vld [vmem:[%s543 + $0x127] sm:$0xff]
        %v691 = vld [vmem:[%s543 + $0x12f] sm:$0xff]
        %v692 = vld [vmem:[%s543 + $0x147] sm:$0xff]
        %v693 = vld [vmem:[%s543 + $0x14f] sm:$0xff]
        %v694 = vld [vmem:[%s543 + $0x167] sm:$0xff]
        %v695 = vld [vmem:[%s543 + $0x16f] sm:$0xff]
        %v696 = vld [vmem:[%s543 + $0x187] sm:$0xff]
        %v697 = vld [vmem:[%s543 + $0x18f] sm:$0xff]
        %v698 = vld [vmem:[%s543 + $0x1a7] sm:$0xff]
        %v699 = vld [vmem:[%s543 + $0x1af] sm:$0xff]
        %v700 = vld [vmem:[%s543 + $0x1c7] sm:$0xff]
        %v701 = vld [vmem:[%s543 + $0x1cf] sm:$0xff]
        %v702 = vld [vmem:[%s543 + $0x1e7] sm:$0xff]
        %v703 = vld [vmem:[%s543 + $0x1ef] sm:$0xff]
        %v704 = vld [vmem:[%s543 + $0x8] sm:$0xff]
        %v705 = vld [vmem:[%s543 + $0x10] sm:$0xff]
        %v706 = vld [vmem:[%s543 + $0x28] sm:$0xff]
        %v707 = vld [vmem:[%s543 + $0x30] sm:$0xff]
        %v708 = vld [vmem:[%s543 + $0x48] sm:$0xff]
        %v709 = vld [vmem:[%s543 + $0x50] sm:$0xff]
        %v710 = vld [vmem:[%s543 + $0x68] sm:$0xff]
        %v711 = vld [vmem:[%s543 + $0x70] sm:$0xff]
        %v712 = vld [vmem:[%s543 + $0x88] sm:$0xff]
        %v713 = vld [vmem:[%s543 + $0x90] sm:$0xff]
        %v714 = vld [vmem:[%s543 + $0xa8] sm:$0xff]
        %v715 = vld [vmem:[%s543 + $0xb0] sm:$0xff]
        %v716 = vld [vmem:[%s543 + $0xc8] sm:$0xff]
        %v717 = vld [vmem:[%s543 + $0xd0] sm:$0xff]
        %v718 = vld [vmem:[%s543 + $0xe8] sm:$0xff]
        %v719 = vld [vmem:[%s543 + $0xf0] sm:$0xff]
        %v720 = vld [vmem:[%s543 + $0x108] sm:$0xff]
        %v721 = vld [vmem:[%s543 + $0x110] sm:$0xff]
        %v722 = vld [vmem:[%s543 + $0x128] sm:$0xff]
        %v723 = vld [vmem:[%s543 + $0x130] sm:$0xff]
        %v724 = vld [vmem:[%s543 + $0x148] sm:$0xff]
        %v725 = vld [vmem:[%s543 + $0x150] sm:$0xff]
        %v726 = vld [vmem:[%s543 + $0x168] sm:$0xff]
        %v727 = vld [vmem:[%s543 + $0x170] sm:$0xff]
        %v728 = vld [vmem:[%s543 + $0x188] sm:$0xff]
        %v729 = vld [vmem:[%s543 + $0x190] sm:$0xff]
        %v730 = vld [vmem:[%s543 + $0x1a8] sm:$0xff]
        %v731 = vld [vmem:[%s543 + $0x1b0] sm:$0xff]
        %v732 = vld [vmem:[%s543 + $0x1c8] sm:$0xff]
        %v733 = vld [vmem:[%s543 + $0x1d0] sm:$0xff]
        %v734 = vld [vmem:[%s543 + $0x1e8] sm:$0xff]
        %v735 = vld [vmem:[%s543 + $0x1f0] sm:$0xff]
        %v736 = vld [vmem:[%s543 + $0x9] sm:$0xff]
        %v737 = vld [vmem:[%s543 + $0x11] sm:$0xff]
        %v738 = vld [vmem:[%s543 + $0x29] sm:$0xff]
        %v739 = vld [vmem:[%s543 + $0x31] sm:$0xff]
        %v740 = vld [vmem:[%s543 + $0x49] sm:$0xff]
        %v741 = vld [vmem:[%s543 + $0x51] sm:$0xff]
        %v742 = vld [vmem:[%s543 + $0x69] sm:$0xff]
        %v743 = vld [vmem:[%s543 + $0x71] sm:$0xff]
        %v744 = vld [vmem:[%s543 + $0x89] sm:$0xff]
        %v745 = vld [vmem:[%s543 + $0x91] sm:$0xff]
        %v746 = vld [vmem:[%s543 + $0xa9] sm:$0xff]
        %v747 = vld [vmem:[%s543 + $0xb1] sm:$0xff]
        %v748 = vld [vmem:[%s543 + $0xc9] sm:$0xff]
        %v749 = vld [vmem:[%s543 + $0xd1] sm:$0xff]
        %v750 = vld [vmem:[%s543 + $0xe9] sm:$0xff]
        %v751 = vld [vmem:[%s543 + $0xf1] sm:$0xff]
        %v752 = vld [vmem:[%s543 + $0x109] sm:$0xff]
        %v753 = vld [vmem:[%s543 + $0x111] sm:$0xff]
        %v754 = vld [vmem:[%s543 + $0x129] sm:$0xff]
        %v755 = vld [vmem:[%s543 + $0x131] sm:$0xff]
        %v756 = vld [vmem:[%s543 + $0x149] sm:$0xff]
        %v757 = vld [vmem:[%s543 + $0x151] sm:$0xff]
        %v758 = vld [vmem:[%s543 + $0x169] sm:$0xff]
        %v759 = vld [vmem:[%s543 + $0x171] sm:$0xff]
        %v760 = vld [vmem:[%s543 + $0x189] sm:$0xff]
        %v761 = vld [vmem:[%s543 + $0x191] sm:$0xff]
        %v762 = vld [vmem:[%s543 + $0x1a9] sm:$0xff]
        %v763 = vld [vmem:[%s543 + $0x1b1] sm:$0xff]
        %v764 = vld [vmem:[%s543 + $0x1c9] sm:$0xff]
        %v765 = vld [vmem:[%s543 + $0x1d1] sm:$0xff]
        %v766 = vld [vmem:[%s543 + $0x1e9] sm:$0xff]
        %v767 = vld [vmem:[%s543 + $0x1f1] sm:$0xff]
        %s768 = scalar_lea.vmem [#allocation2], 64
        %v769 = vld [vmem:[%s768 + $0x7] sm:$0xff]
        %v770 = vld [vmem:[%s768 + $0xf] sm:$0xff]
        %v771 = vld [vmem:[%s768 + $0x27] sm:$0xff]
        %v772 = vld [vmem:[%s768 + $0x2f] sm:$0xff]
        %v773 = vld [vmem:[%s768 + $0x47] sm:$0xff]
        %v774 = vld [vmem:[%s768 + $0x4f] sm:$0xff]
        %v775 = vld [vmem:[%s768 + $0x67] sm:$0xff]
        %v776 = vld [vmem:[%s768 + $0x6f] sm:$0xff]
        %v777 = vld [vmem:[%s768 + $0x87] sm:$0xff]
        %v778 = vld [vmem:[%s768 + $0x8f] sm:$0xff]
        %v779 = vld [vmem:[%s768 + $0xa7] sm:$0xff]
        %v780 = vld [vmem:[%s768 + $0xaf] sm:$0xff]
        %v781 = vld [vmem:[%s768 + $0xc7] sm:$0xff]
        %v782 = vld [vmem:[%s768 + $0xcf] sm:$0xff]
        %v783 = vld [vmem:[%s768 + $0xe7] sm:$0xff]
        %v784 = vld [vmem:[%s768 + $0xef] sm:$0xff]
        %v785 = vld [vmem:[%s768 + $0x107] sm:$0xff]
        %v786 = vld [vmem:[%s768 + $0x10f] sm:$0xff]
        %v787 = vld [vmem:[%s768 + $0x127] sm:$0xff]
        %v788 = vld [vmem:[%s768 + $0x12f] sm:$0xff]
        %v789 = vld [vmem:[%s768 + $0x147] sm:$0xff]
        %v790 = vld [vmem:[%s768 + $0x14f] sm:$0xff]
        %v791 = vld [vmem:[%s768 + $0x167] sm:$0xff]
        %v792 = vld [vmem:[%s768 + $0x16f] sm:$0xff]
        %v793 = vld [vmem:[%s768 + $0x187] sm:$0xff]
        %v794 = vld [vmem:[%s768 + $0x18f] sm:$0xff]
        %v795 = vld [vmem:[%s768 + $0x1a7] sm:$0xff]
        %v796 = vld [vmem:[%s768 + $0x1af] sm:$0xff]
        %v797 = vld [vmem:[%s768 + $0x1c7] sm:$0xff]
        %v798 = vld [vmem:[%s768 + $0x1cf] sm:$0xff]
        %v799 = vld [vmem:[%s768 + $0x1e7] sm:$0xff]
        %v800 = vld [vmem:[%s768 + $0x1ef] sm:$0xff]
        %v801 = vld [vmem:[%s768 + $0x8] sm:$0xff]
        %v802 = vld [vmem:[%s768 + $0x10] sm:$0xff]
        %v803 = vld [vmem:[%s768 + $0x28] sm:$0xff]
        %v804 = vld [vmem:[%s768 + $0x30] sm:$0xff]
        %v805 = vld [vmem:[%s768 + $0x48] sm:$0xff]
        %v806 = vld [vmem:[%s768 + $0x50] sm:$0xff]
        %v807 = vld [vmem:[%s768 + $0x68] sm:$0xff]
        %v808 = vld [vmem:[%s768 + $0x70] sm:$0xff]
        %v809 = vld [vmem:[%s768 + $0x88] sm:$0xff]
        %v810 = vld [vmem:[%s768 + $0x90] sm:$0xff]
        %v811 = vld [vmem:[%s768 + $0xa8] sm:$0xff]
        %v812 = vld [vmem:[%s768 + $0xb0] sm:$0xff]
        %v813 = vld [vmem:[%s768 + $0xc8] sm:$0xff]
        %v814 = vld [vmem:[%s768 + $0xd0] sm:$0xff]
        %v815 = vld [vmem:[%s768 + $0xe8] sm:$0xff]
        %v816 = vld [vmem:[%s768 + $0xf0] sm:$0xff]
        %v817 = vld [vmem:[%s768 + $0x108] sm:$0xff]
        %v818 = vld [vmem:[%s768 + $0x110] sm:$0xff]
        %v819 = vld [vmem:[%s768 + $0x128] sm:$0xff]
        %v820 = vld [vmem:[%s768 + $0x130] sm:$0xff]
        %v821 = vld [vmem:[%s768 + $0x148] sm:$0xff]
        %v822 = vld [vmem:[%s768 + $0x150] sm:$0xff]
        %v823 = vld [vmem:[%s768 + $0x168] sm:$0xff]
        %v824 = vld [vmem:[%s768 + $0x170] sm:$0xff]
        %v825 = vld [vmem:[%s768 + $0x188] sm:$0xff]
        %v826 = vld [vmem:[%s768 + $0x190] sm:$0xff]
        %v827 = vld [vmem:[%s768 + $0x1a8] sm:$0xff]
        %v828 = vld [vmem:[%s768 + $0x1b0] sm:$0xff]
        %v829 = vld [vmem:[%s768 + $0x1c8] sm:$0xff]
        %v830 = vld [vmem:[%s768 + $0x1d0] sm:$0xff]
        %v831 = vld [vmem:[%s768 + $0x1e8] sm:$0xff]
        %v832 = vld [vmem:[%s768 + $0x1f0] sm:$0xff]
        %v833 = vld [vmem:[%s768 + $0x9] sm:$0xff]
        %v834 = vld [vmem:[%s768 + $0x11] sm:$0xff]
        %v835 = vld [vmem:[%s768 + $0x29] sm:$0xff]
        %v836 = vld [vmem:[%s768 + $0x31] sm:$0xff]
        %v837 = vld [vmem:[%s768 + $0x49] sm:$0xff]
        %v838 = vld [vmem:[%s768 + $0x51] sm:$0xff]
        %v839 = vld [vmem:[%s768 + $0x69] sm:$0xff]
        %v840 = vld [vmem:[%s768 + $0x71] sm:$0xff]
        %v841 = vld [vmem:[%s768 + $0x89] sm:$0xff]
        %v842 = vld [vmem:[%s768 + $0x91] sm:$0xff]
        %v843 = vld [vmem:[%s768 + $0xa9] sm:$0xff]
        %v844 = vld [vmem:[%s768 + $0xb1] sm:$0xff]
        %v845 = vld [vmem:[%s768 + $0xc9] sm:$0xff]
        %v846 = vld [vmem:[%s768 + $0xd1] sm:$0xff]
        %v847 = vld [vmem:[%s768 + $0xe9] sm:$0xff]
        %v848 = vld [vmem:[%s768 + $0xf1] sm:$0xff]
        %v849 = vld [vmem:[%s768 + $0x109] sm:$0xff]
        %v850 = vld [vmem:[%s768 + $0x111] sm:$0xff]
        %v851 = vld [vmem:[%s768 + $0x129] sm:$0xff]
        %v852 = vld [vmem:[%s768 + $0x131] sm:$0xff]
        %v853 = vld [vmem:[%s768 + $0x149] sm:$0xff]
        %v854 = vld [vmem:[%s768 + $0x151] sm:$0xff]
        %v855 = vld [vmem:[%s768 + $0x169] sm:$0xff]
        %v856 = vld [vmem:[%s768 + $0x171] sm:$0xff]
        %v857 = vld [vmem:[%s768 + $0x189] sm:$0xff]
        %v858 = vld [vmem:[%s768 + $0x191] sm:$0xff]
        %v859 = vld [vmem:[%s768 + $0x1a9] sm:$0xff]
        %v860 = vld [vmem:[%s768 + $0x1b1] sm:$0xff]
        %v861 = vld [vmem:[%s768 + $0x1c9] sm:$0xff]
        %v862 = vld [vmem:[%s768 + $0x1d1] sm:$0xff]
        %v863 = vld [vmem:[%s768 + $0x1e9] sm:$0xff]
        %v864 = vld [vmem:[%s768 + $0x1f1] sm:$0xff]
        %897 = vrot.lane.b32.xlu0 %v608, 4
        %v898 = vpop.permute.xlu0 %897
        %899 = vrot.lane.b32.xlu0 %v609, 4
        %v900 = vpop.permute.xlu0 %899
        %901 = vrot.lane.b32.xlu0 %v610, 4
        %v902 = vpop.permute.xlu0 %901
        %903 = vrot.lane.b32.xlu0 %v611, 4
        %v904 = vpop.permute.xlu0 %903
        %905 = vrot.lane.b32.xlu0 %v612, 4
        %v906 = vpop.permute.xlu0 %905
        %907 = vrot.lane.b32.xlu0 %v613, 4
        %v908 = vpop.permute.xlu0 %907
        %909 = vrot.lane.b32.xlu0 %v614, 4
        %v910 = vpop.permute.xlu0 %909
        %911 = vrot.lane.b32.xlu0 %v615, 4
        %v912 = vpop.permute.xlu0 %911
        %913 = vrot.lane.b32.xlu0 %v616, 4
        %v914 = vpop.permute.xlu0 %913
        %915 = vrot.lane.b32.xlu0 %v617, 4
        %v916 = vpop.permute.xlu0 %915
        %917 = vrot.lane.b32.xlu0 %v618, 4
        %v918 = vpop.permute.xlu0 %917
        %919 = vrot.lane.b32.xlu0 %v619, 4
        %v920 = vpop.permute.xlu0 %919
        %921 = vrot.lane.b32.xlu0 %v620, 4
        %v922 = vpop.permute.xlu0 %921
        %923 = vrot.lane.b32.xlu0 %v621, 4
        %v924 = vpop.permute.xlu0 %923
        %925 = vrot.lane.b32.xlu0 %v622, 4
        %v926 = vpop.permute.xlu0 %925
        %927 = vrot.lane.b32.xlu0 %v623, 4
        %v928 = vpop.permute.xlu0 %927
        %929 = vrot.lane.b32.xlu0 %v624, 4
        %v930 = vpop.permute.xlu0 %929
        %931 = vrot.lane.b32.xlu0 %v625, 4
        %v932 = vpop.permute.xlu0 %931
        %933 = vrot.lane.b32.xlu0 %v626, 4
        %v934 = vpop.permute.xlu0 %933
        %935 = vrot.lane.b32.xlu0 %v627, 4
        %v936 = vpop.permute.xlu0 %935
        %937 = vrot.lane.b32.xlu0 %v628, 4
        %v938 = vpop.permute.xlu0 %937
        %939 = vrot.lane.b32.xlu0 %v629, 4
        %v940 = vpop.permute.xlu0 %939
        %941 = vrot.lane.b32.xlu0 %v630, 4
        %v942 = vpop.permute.xlu0 %941
        %943 = vrot.lane.b32.xlu0 %v631, 4
        %v944 = vpop.permute.xlu0 %943
        %945 = vrot.lane.b32.xlu0 %v632, 4
        %v946 = vpop.permute.xlu0 %945
        %947 = vrot.lane.b32.xlu0 %v633, 4
        %v948 = vpop.permute.xlu0 %947
        %949 = vrot.lane.b32.xlu0 %v634, 4
        %v950 = vpop.permute.xlu0 %949
        %951 = vrot.lane.b32.xlu0 %v635, 4
        %v952 = vpop.permute.xlu0 %951
        %953 = vrot.lane.b32.xlu0 %v636, 4
        %v954 = vpop.permute.xlu0 %953
        %955 = vrot.lane.b32.xlu0 %v637, 4
        %v956 = vpop.permute.xlu0 %955
        %957 = vrot.lane.b32.xlu0 %v638, 4
        %v958 = vpop.permute.xlu0 %957
        %959 = vrot.lane.b32.xlu0 %v639, 4
        %v960 = vpop.permute.xlu0 %959
        %1025 = vrot.lane.b32.xlu0 %v640, 8
        %v1026 = vpop.permute.xlu0 %1025
        %1027 = vrot.lane.b32.xlu0 %v641, 8
        %v1028 = vpop.permute.xlu0 %1027
        %1029 = vrot.lane.b32.xlu0 %v642, 8
        %v1030 = vpop.permute.xlu0 %1029
        %1031 = vrot.lane.b32.xlu0 %v643, 8
        %v1032 = vpop.permute.xlu0 %1031
        %1033 = vrot.lane.b32.xlu0 %v644, 8
        %v1034 = vpop.permute.xlu0 %1033
        %1035 = vrot.lane.b32.xlu0 %v645, 8
        %v1036 = vpop.permute.xlu0 %1035
        %1037 = vrot.lane.b32.xlu0 %v646, 8
        %v1038 = vpop.permute.xlu0 %1037
        %1039 = vrot.lane.b32.xlu0 %v647, 8
        %v1040 = vpop.permute.xlu0 %1039
        %1041 = vrot.lane.b32.xlu0 %v648, 8
        %v1042 = vpop.permute.xlu0 %1041
        %1043 = vrot.lane.b32.xlu0 %v649, 8
        %v1044 = vpop.permute.xlu0 %1043
        %1045 = vrot.lane.b32.xlu0 %v650, 8
        %v1046 = vpop.permute.xlu0 %1045
        %1047 = vrot.lane.b32.xlu0 %v651, 8
        %v1048 = vpop.permute.xlu0 %1047
        %1049 = vrot.lane.b32.xlu0 %v652, 8
        %v1050 = vpop.permute.xlu0 %1049
        %1051 = vrot.lane.b32.xlu0 %v653, 8
        %v1052 = vpop.permute.xlu0 %1051
        %1053 = vrot.lane.b32.xlu0 %v654, 8
        %v1054 = vpop.permute.xlu0 %1053
        %1055 = vrot.lane.b32.xlu0 %v655, 8
        %v1056 = vpop.permute.xlu0 %1055
        %1057 = vrot.lane.b32.xlu0 %v656, 8
        %v1058 = vpop.permute.xlu0 %1057
        %1059 = vrot.lane.b32.xlu0 %v657, 8
        %v1060 = vpop.permute.xlu0 %1059
        %1061 = vrot.lane.b32.xlu0 %v658, 8
        %v1062 = vpop.permute.xlu0 %1061
        %1063 = vrot.lane.b32.xlu0 %v659, 8
        %v1064 = vpop.permute.xlu0 %1063
        %1065 = vrot.lane.b32.xlu0 %v660, 8
        %v1066 = vpop.permute.xlu0 %1065
        %1067 = vrot.lane.b32.xlu0 %v661, 8
        %v1068 = vpop.permute.xlu0 %1067
        %1069 = vrot.lane.b32.xlu0 %v662, 8
        %v1070 = vpop.permute.xlu0 %1069
        %1071 = vrot.lane.b32.xlu0 %v663, 8
        %v1072 = vpop.permute.xlu0 %1071
        %1073 = vrot.lane.b32.xlu0 %v664, 8
        %v1074 = vpop.permute.xlu0 %1073
        %1075 = vrot.lane.b32.xlu0 %v665, 8
        %v1076 = vpop.permute.xlu0 %1075
        %1077 = vrot.lane.b32.xlu0 %v666, 8
        %v1078 = vpop.permute.xlu0 %1077
        %1079 = vrot.lane.b32.xlu0 %v667, 8
        %v1080 = vpop.permute.xlu0 %1079
        %1081 = vrot.lane.b32.xlu0 %v668, 8
        %v1082 = vpop.permute.xlu0 %1081
        %1083 = vrot.lane.b32.xlu0 %v669, 8
        %v1084 = vpop.permute.xlu0 %1083
        %1085 = vrot.lane.b32.xlu0 %v670, 8
        %v1086 = vpop.permute.xlu0 %1085
        %1087 = vrot.lane.b32.xlu0 %v671, 8
        %v1088 = vpop.permute.xlu0 %1087
        %1153 = vrot.lane.b32.xlu0 %v672, 12
        %v1154 = vpop.permute.xlu0 %1153
        %1155 = vrot.lane.b32.xlu0 %v673, 12
        %v1156 = vpop.permute.xlu0 %1155
        %1157 = vrot.lane.b32.xlu0 %v674, 12
        %v1158 = vpop.permute.xlu0 %1157
        %1159 = vrot.lane.b32.xlu0 %v675, 12
        %v1160 = vpop.permute.xlu0 %1159
        %1161 = vrot.lane.b32.xlu0 %v676, 12
        %v1162 = vpop.permute.xlu0 %1161
        %1163 = vrot.lane.b32.xlu0 %v677, 12
        %v1164 = vpop.permute.xlu0 %1163
        %1165 = vrot.lane.b32.xlu0 %v678, 12
        %v1166 = vpop.permute.xlu0 %1165
        %1167 = vrot.lane.b32.xlu0 %v679, 12
        %v1168 = vpop.permute.xlu0 %1167
        %1169 = vrot.lane.b32.xlu0 %v680, 12
        %v1170 = vpop.permute.xlu0 %1169
        %1171 = vrot.lane.b32.xlu0 %v681, 12
        %v1172 = vpop.permute.xlu0 %1171
        %1173 = vrot.lane.b32.xlu0 %v682, 12
        %v1174 = vpop.permute.xlu0 %1173
        %1175 = vrot.lane.b32.xlu0 %v683, 12
        %v1176 = vpop.permute.xlu0 %1175
        %1177 = vrot.lane.b32.xlu0 %v684, 12
        %v1178 = vpop.permute.xlu0 %1177
        %1179 = vrot.lane.b32.xlu0 %v685, 12
        %v1180 = vpop.permute.xlu0 %1179
        %1181 = vrot.lane.b32.xlu0 %v686, 12
        %v1182 = vpop.permute.xlu0 %1181
        %1183 = vrot.lane.b32.xlu0 %v687, 12
        %v1184 = vpop.permute.xlu0 %1183
        %1185 = vrot.lane.b32.xlu0 %v688, 12
        %v1186 = vpop.permute.xlu0 %1185
        %1187 = vrot.lane.b32.xlu0 %v689, 12
        %v1188 = vpop.permute.xlu0 %1187
        %1189 = vrot.lane.b32.xlu0 %v690, 12
        %v1190 = vpop.permute.xlu0 %1189
        %1191 = vrot.lane.b32.xlu0 %v691, 12
        %v1192 = vpop.permute.xlu0 %1191
        %1193 = vrot.lane.b32.xlu0 %v692, 12
        %v1194 = vpop.permute.xlu0 %1193
        %1195 = vrot.lane.b32.xlu0 %v693, 12
        %v1196 = vpop.permute.xlu0 %1195
        %1197 = vrot.lane.b32.xlu0 %v694, 12
        %v1198 = vpop.permute.xlu0 %1197
        %1199 = vrot.lane.b32.xlu0 %v695, 12
        %v1200 = vpop.permute.xlu0 %1199
        %1201 = vrot.lane.b32.xlu0 %v696, 12
        %v1202 = vpop.permute.xlu0 %1201
        %1203 = vrot.lane.b32.xlu0 %v697, 12
        %v1204 = vpop.permute.xlu0 %1203
        %1205 = vrot.lane.b32.xlu0 %v698, 12
        %v1206 = vpop.permute.xlu0 %1205
        %1207 = vrot.lane.b32.xlu0 %v699, 12
        %v1208 = vpop.permute.xlu0 %1207
        %1209 = vrot.lane.b32.xlu0 %v700, 12
        %v1210 = vpop.permute.xlu0 %1209
        %1211 = vrot.lane.b32.xlu0 %v701, 12
        %v1212 = vpop.permute.xlu0 %1211
        %1213 = vrot.lane.b32.xlu0 %v702, 12
        %v1214 = vpop.permute.xlu0 %1213
        %1215 = vrot.lane.b32.xlu0 %v703, 12
        %v1216 = vpop.permute.xlu0 %1215
        %1281 = vrot.lane.b32.xlu0 %v704, 16
        %v1282 = vpop.permute.xlu0 %1281
        %1283 = vrot.lane.b32.xlu0 %v705, 16
        %v1284 = vpop.permute.xlu0 %1283
        %1285 = vrot.lane.b32.xlu0 %v706, 16
        %v1286 = vpop.permute.xlu0 %1285
        %1287 = vrot.lane.b32.xlu0 %v707, 16
        %v1288 = vpop.permute.xlu0 %1287
        %1289 = vrot.lane.b32.xlu0 %v708, 16
        %v1290 = vpop.permute.xlu0 %1289
        %1291 = vrot.lane.b32.xlu0 %v709, 16
        %v1292 = vpop.permute.xlu0 %1291
        %1293 = vrot.lane.b32.xlu0 %v710, 16
        %v1294 = vpop.permute.xlu0 %1293
        %1295 = vrot.lane.b32.xlu0 %v711, 16
        %v1296 = vpop.permute.xlu0 %1295
        %1297 = vrot.lane.b32.xlu0 %v712, 16
        %v1298 = vpop.permute.xlu0 %1297
        %1299 = vrot.lane.b32.xlu0 %v713, 16
        %v1300 = vpop.permute.xlu0 %1299
        %1301 = vrot.lane.b32.xlu0 %v714, 16
        %v1302 = vpop.permute.xlu0 %1301
        %1303 = vrot.lane.b32.xlu0 %v715, 16
        %v1304 = vpop.permute.xlu0 %1303
        %1305 = vrot.lane.b32.xlu0 %v716, 16
        %v1306 = vpop.permute.xlu0 %1305
        %1307 = vrot.lane.b32.xlu0 %v717, 16
        %v1308 = vpop.permute.xlu0 %1307
        %1309 = vrot.lane.b32.xlu0 %v718, 16
        %v1310 = vpop.permute.xlu0 %1309
        %1311 = vrot.lane.b32.xlu0 %v719, 16
        %v1312 = vpop.permute.xlu0 %1311
        %1313 = vrot.lane.b32.xlu0 %v720, 16
        %v1314 = vpop.permute.xlu0 %1313
        %1315 = vrot.lane.b32.xlu0 %v721, 16
        %v1316 = vpop.permute.xlu0 %1315
        %1317 = vrot.lane.b32.xlu0 %v722, 16
        %v1318 = vpop.permute.xlu0 %1317
        %1319 = vrot.lane.b32.xlu0 %v723, 16
        %v1320 = vpop.permute.xlu0 %1319
        %1321 = vrot.lane.b32.xlu0 %v724, 16
        %v1322 = vpop.permute.xlu0 %1321
        %1323 = vrot.lane.b32.xlu0 %v725, 16
        %v1324 = vpop.permute.xlu0 %1323
        %1325 = vrot.lane.b32.xlu0 %v726, 16
        %v1326 = vpop.permute.xlu0 %1325
        %1327 = vrot.lane.b32.xlu0 %v727, 16
        %v1328 = vpop.permute.xlu0 %1327
        %1329 = vrot.lane.b32.xlu0 %v728, 16
        %v1330 = vpop.permute.xlu0 %1329
        %1331 = vrot.lane.b32.xlu0 %v729, 16
        %v1332 = vpop.permute.xlu0 %1331
        %1333 = vrot.lane.b32.xlu0 %v730, 16
        %v1334 = vpop.permute.xlu0 %1333
        %1335 = vrot.lane.b32.xlu0 %v731, 16
        %v1336 = vpop.permute.xlu0 %1335
        %1337 = vrot.lane.b32.xlu0 %v732, 16
        %v1338 = vpop.permute.xlu0 %1337
        %1339 = vrot.lane.b32.xlu0 %v733, 16
        %v1340 = vpop.permute.xlu0 %1339
        %1341 = vrot.lane.b32.xlu0 %v734, 16
        %v1342 = vpop.permute.xlu0 %1341
        %1343 = vrot.lane.b32.xlu0 %v735, 16
        %v1344 = vpop.permute.xlu0 %1343
        %1409 = vrot.lane.b32.xlu0 %v736, 20
        %v1410 = vpop.permute.xlu0 %1409
        %1411 = vrot.lane.b32.xlu0 %v737, 20
        %v1412 = vpop.permute.xlu0 %1411
        %1413 = vrot.lane.b32.xlu0 %v738, 20
        %v1414 = vpop.permute.xlu0 %1413
        %1415 = vrot.lane.b32.xlu0 %v739, 20
        %v1416 = vpop.permute.xlu0 %1415
        %1417 = vrot.lane.b32.xlu0 %v740, 20
        %v1418 = vpop.permute.xlu0 %1417
        %1419 = vrot.lane.b32.xlu0 %v741, 20
        %v1420 = vpop.permute.xlu0 %1419
        %1421 = vrot.lane.b32.xlu0 %v742, 20
        %v1422 = vpop.permute.xlu0 %1421
        %1423 = vrot.lane.b32.xlu0 %v743, 20
        %v1424 = vpop.permute.xlu0 %1423
        %1425 = vrot.lane.b32.xlu0 %v744, 20
        %v1426 = vpop.permute.xlu0 %1425
        %1427 = vrot.lane.b32.xlu0 %v745, 20
        %v1428 = vpop.permute.xlu0 %1427
        %1429 = vrot.lane.b32.xlu0 %v746, 20
        %v1430 = vpop.permute.xlu0 %1429
        %1431 = vrot.lane.b32.xlu0 %v747, 20
        %v1432 = vpop.permute.xlu0 %1431
        %1433 = vrot.lane.b32.xlu0 %v748, 20
        %v1434 = vpop.permute.xlu0 %1433
        %1435 = vrot.lane.b32.xlu0 %v749, 20
        %v1436 = vpop.permute.xlu0 %1435
        %1437 = vrot.lane.b32.xlu0 %v750, 20
        %v1438 = vpop.permute.xlu0 %1437
        %1439 = vrot.lane.b32.xlu0 %v751, 20
        %v1440 = vpop.permute.xlu0 %1439
        %1441 = vrot.lane.b32.xlu0 %v752, 20
        %v1442 = vpop.permute.xlu0 %1441
        %1443 = vrot.lane.b32.xlu0 %v753, 20
        %v1444 = vpop.permute.xlu0 %1443
        %1445 = vrot.lane.b32.xlu0 %v754, 20
        %v1446 = vpop.permute.xlu0 %1445
        %1447 = vrot.lane.b32.xlu0 %v755, 20
        %v1448 = vpop.permute.xlu0 %1447
        %1449 = vrot.lane.b32.xlu0 %v756, 20
        %v1450 = vpop.permute.xlu0 %1449
        %1451 = vrot.lane.b32.xlu0 %v757, 20
        %v1452 = vpop.permute.xlu0 %1451
        %1453 = vrot.lane.b32.xlu0 %v758, 20
        %v1454 = vpop.permute.xlu0 %1453
        %1455 = vrot.lane.b32.xlu0 %v759, 20
        %v1456 = vpop.permute.xlu0 %1455
        %1457 = vrot.lane.b32.xlu0 %v760, 20
        %v1458 = vpop.permute.xlu0 %1457
        %1459 = vrot.lane.b32.xlu0 %v761, 20
        %v1460 = vpop.permute.xlu0 %1459
        %1461 = vrot.lane.b32.xlu0 %v762, 20
        %v1462 = vpop.permute.xlu0 %1461
        %1463 = vrot.lane.b32.xlu0 %v763, 20
        %v1464 = vpop.permute.xlu0 %1463
        %1465 = vrot.lane.b32.xlu0 %v764, 20
        %v1466 = vpop.permute.xlu0 %1465
        %1467 = vrot.lane.b32.xlu0 %v765, 20
        %v1468 = vpop.permute.xlu0 %1467
        %1469 = vrot.lane.b32.xlu0 %v766, 20
        %v1470 = vpop.permute.xlu0 %1469
        %1471 = vrot.lane.b32.xlu0 %v767, 20
        %v1472 = vpop.permute.xlu0 %1471
        %1537 = vrot.lane.b32.xlu0 %v769, 24
        %v1538 = vpop.permute.xlu0 %1537
        %1539 = vrot.lane.b32.xlu0 %v770, 24
        %v1540 = vpop.permute.xlu0 %1539
        %1541 = vrot.lane.b32.xlu0 %v771, 24
        %v1542 = vpop.permute.xlu0 %1541
        %1543 = vrot.lane.b32.xlu0 %v772, 24
        %v1544 = vpop.permute.xlu0 %1543
        %1545 = vrot.lane.b32.xlu0 %v773, 24
        %v1546 = vpop.permute.xlu0 %1545
        %1547 = vrot.lane.b32.xlu0 %v774, 24
        %v1548 = vpop.permute.xlu0 %1547
        %1549 = vrot.lane.b32.xlu0 %v775, 24
        %v1550 = vpop.permute.xlu0 %1549
        %1551 = vrot.lane.b32.xlu0 %v776, 24
        %v1552 = vpop.permute.xlu0 %1551
        %1553 = vrot.lane.b32.xlu0 %v777, 24
        %v1554 = vpop.permute.xlu0 %1553
        %1555 = vrot.lane.b32.xlu0 %v778, 24
        %v1556 = vpop.permute.xlu0 %1555
        %1557 = vrot.lane.b32.xlu0 %v779, 24
        %v1558 = vpop.permute.xlu0 %1557
        %1559 = vrot.lane.b32.xlu0 %v780, 24
        %v1560 = vpop.permute.xlu0 %1559
        %1561 = vrot.lane.b32.xlu0 %v781, 24
        %v1562 = vpop.permute.xlu0 %1561
        %1563 = vrot.lane.b32.xlu0 %v782, 24
        %v1564 = vpop.permute.xlu0 %1563
        %1565 = vrot.lane.b32.xlu0 %v783, 24
        %v1566 = vpop.permute.xlu0 %1565
        %1567 = vrot.lane.b32.xlu0 %v784, 24
        %v1568 = vpop.permute.xlu0 %1567
        %1569 = vrot.lane.b32.xlu0 %v785, 24
        %v1570 = vpop.permute.xlu0 %1569
        %1571 = vrot.lane.b32.xlu0 %v786, 24
        %v1572 = vpop.permute.xlu0 %1571
        %1573 = vrot.lane.b32.xlu0 %v787, 24
        %v1574 = vpop.permute.xlu0 %1573
        %1575 = vrot.lane.b32.xlu0 %v788, 24
        %v1576 = vpop.permute.xlu0 %1575
        %1577 = vrot.lane.b32.xlu0 %v789, 24
        %v1578 = vpop.permute.xlu0 %1577
        %1579 = vrot.lane.b32.xlu0 %v790, 24
        %v1580 = vpop.permute.xlu0 %1579
        %1581 = vrot.lane.b32.xlu0 %v791, 24
        %v1582 = vpop.permute.xlu0 %1581
        %1583 = vrot.lane.b32.xlu0 %v792, 24
        %v1584 = vpop.permute.xlu0 %1583
        %1585 = vrot.lane.b32.xlu0 %v793, 24
        %v1586 = vpop.permute.xlu0 %1585
        %1587 = vrot.lane.b32.xlu0 %v794, 24
        %v1588 = vpop.permute.xlu0 %1587
        %1589 = vrot.lane.b32.xlu0 %v795, 24
        %v1590 = vpop.permute.xlu0 %1589
        %1591 = vrot.lane.b32.xlu0 %v796, 24
        %v1592 = vpop.permute.xlu0 %1591
        %1593 = vrot.lane.b32.xlu0 %v797, 24
        %v1594 = vpop.permute.xlu0 %1593
        %1595 = vrot.lane.b32.xlu0 %v798, 24
        %v1596 = vpop.permute.xlu0 %1595
        %1597 = vrot.lane.b32.xlu0 %v799, 24
        %v1598 = vpop.permute.xlu0 %1597
        %1599 = vrot.lane.b32.xlu0 %v800, 24
        %v1600 = vpop.permute.xlu0 %1599
        %1665 = vrot.lane.b32.xlu0 %v801, 28
        %v1666 = vpop.permute.xlu0 %1665
        %1667 = vrot.lane.b32.xlu0 %v802, 28
        %v1668 = vpop.permute.xlu0 %1667
        %1669 = vrot.lane.b32.xlu0 %v803, 28
        %v1670 = vpop.permute.xlu0 %1669
        %1671 = vrot.lane.b32.xlu0 %v804, 28
        %v1672 = vpop.permute.xlu0 %1671
        %1673 = vrot.lane.b32.xlu0 %v805, 28
        %v1674 = vpop.permute.xlu0 %1673
        %1675 = vrot.lane.b32.xlu0 %v806, 28
        %v1676 = vpop.permute.xlu0 %1675
        %1677 = vrot.lane.b32.xlu0 %v807, 28
        %v1678 = vpop.permute.xlu0 %1677
        %1679 = vrot.lane.b32.xlu0 %v808, 28
        %v1680 = vpop.permute.xlu0 %1679
        %1681 = vrot.lane.b32.xlu0 %v809, 28
        %v1682 = vpop.permute.xlu0 %1681
        %1683 = vrot.lane.b32.xlu0 %v810, 28
        %v1684 = vpop.permute.xlu0 %1683
        %1685 = vrot.lane.b32.xlu0 %v811, 28
        %v1686 = vpop.permute.xlu0 %1685
        %1687 = vrot.lane.b32.xlu0 %v812, 28
        %v1688 = vpop.permute.xlu0 %1687
        %1689 = vrot.lane.b32.xlu0 %v813, 28
        %v1690 = vpop.permute.xlu0 %1689
        %1691 = vrot.lane.b32.xlu0 %v814, 28
        %v1692 = vpop.permute.xlu0 %1691
        %1693 = vrot.lane.b32.xlu0 %v815, 28
        %v1694 = vpop.permute.xlu0 %1693
        %1695 = vrot.lane.b32.xlu0 %v816, 28
        %v1696 = vpop.permute.xlu0 %1695
        %1697 = vrot.lane.b32.xlu0 %v817, 28
        %v1698 = vpop.permute.xlu0 %1697
        %1699 = vrot.lane.b32.xlu0 %v818, 28
        %v1700 = vpop.permute.xlu0 %1699
        %1701 = vrot.lane.b32.xlu0 %v819, 28
        %v1702 = vpop.permute.xlu0 %1701
        %1703 = vrot.lane.b32.xlu0 %v820, 28
        %v1704 = vpop.permute.xlu0 %1703
        %1705 = vrot.lane.b32.xlu0 %v821, 28
        %v1706 = vpop.permute.xlu0 %1705
        %1707 = vrot.lane.b32.xlu0 %v822, 28
        %v1708 = vpop.permute.xlu0 %1707
        %1709 = vrot.lane.b32.xlu0 %v823, 28
        %v1710 = vpop.permute.xlu0 %1709
        %1711 = vrot.lane.b32.xlu0 %v824, 28
        %v1712 = vpop.permute.xlu0 %1711
        %1713 = vrot.lane.b32.xlu0 %v825, 28
        %v1714 = vpop.permute.xlu0 %1713
        %1715 = vrot.lane.b32.xlu0 %v826, 28
        %v1716 = vpop.permute.xlu0 %1715
        %1717 = vrot.lane.b32.xlu0 %v827, 28
        %v1718 = vpop.permute.xlu0 %1717
        %1719 = vrot.lane.b32.xlu0 %v828, 28
        %v1720 = vpop.permute.xlu0 %1719
        %1721 = vrot.lane.b32.xlu0 %v829, 28
        %v1722 = vpop.permute.xlu0 %1721
        %1723 = vrot.lane.b32.xlu0 %v830, 28
        %v1724 = vpop.permute.xlu0 %1723
        %1725 = vrot.lane.b32.xlu0 %v831, 28
        %v1726 = vpop.permute.xlu0 %1725
        %1727 = vrot.lane.b32.xlu0 %v832, 28
        %v1728 = vpop.permute.xlu0 %1727
        %1793 = vrot.lane.b32.xlu0 %v833, 32
        %v1794 = vpop.permute.xlu0 %1793
        %1795 = vrot.lane.b32.xlu0 %v834, 32
        %v1796 = vpop.permute.xlu0 %1795
        %1797 = vrot.lane.b32.xlu0 %v835, 32
        %v1798 = vpop.permute.xlu0 %1797
        %1799 = vrot.lane.b32.xlu0 %v836, 32
        %v1800 = vpop.permute.xlu0 %1799
        %1801 = vrot.lane.b32.xlu0 %v837, 32
        %v1802 = vpop.permute.xlu0 %1801
        %1803 = vrot.lane.b32.xlu0 %v838, 32
        %v1804 = vpop.permute.xlu0 %1803
        %1805 = vrot.lane.b32.xlu0 %v839, 32
        %v1806 = vpop.permute.xlu0 %1805
        %1807 = vrot.lane.b32.xlu0 %v840, 32
        %v1808 = vpop.permute.xlu0 %1807
        %1809 = vrot.lane.b32.xlu0 %v841, 32
        %v1810 = vpop.permute.xlu0 %1809
        %1811 = vrot.lane.b32.xlu0 %v842, 32
        %v1812 = vpop.permute.xlu0 %1811
        %1813 = vrot.lane.b32.xlu0 %v843, 32
        %v1814 = vpop.permute.xlu0 %1813
        %1815 = vrot.lane.b32.xlu0 %v844, 32
        %v1816 = vpop.permute.xlu0 %1815
        %1817 = vrot.lane.b32.xlu0 %v845, 32
        %v1818 = vpop.permute.xlu0 %1817
        %1819 = vrot.lane.b32.xlu0 %v846, 32
        %v1820 = vpop.permute.xlu0 %1819
        %1821 = vrot.lane.b32.xlu0 %v847, 32
        %v1822 = vpop.permute.xlu0 %1821
        %1823 = vrot.lane.b32.xlu0 %v848, 32
        %v1824 = vpop.permute.xlu0 %1823
        %1825 = vrot.lane.b32.xlu0 %v849, 32
        %v1826 = vpop.permute.xlu0 %1825
        %1827 = vrot.lane.b32.xlu0 %v850, 32
        %v1828 = vpop.permute.xlu0 %1827
        %1829 = vrot.lane.b32.xlu0 %v851, 32
        %v1830 = vpop.permute.xlu0 %1829
        %1831 = vrot.lane.b32.xlu0 %v852, 32
        %v1832 = vpop.permute.xlu0 %1831
        %1833 = vrot.lane.b32.xlu0 %v853, 32
        %v1834 = vpop.permute.xlu0 %1833
        %1835 = vrot.lane.b32.xlu0 %v854, 32
        %v1836 = vpop.permute.xlu0 %1835
        %1837 = vrot.lane.b32.xlu0 %v855, 32
        %v1838 = vpop.permute.xlu0 %1837
        %1839 = vrot.lane.b32.xlu0 %v856, 32
        %v1840 = vpop.permute.xlu0 %1839
        %1841 = vrot.lane.b32.xlu0 %v857, 32
        %v1842 = vpop.permute.xlu0 %1841
        %1843 = vrot.lane.b32.xlu0 %v858, 32
        %v1844 = vpop.permute.xlu0 %1843
        %1845 = vrot.lane.b32.xlu0 %v859, 32
        %v1846 = vpop.permute.xlu0 %1845
        %1847 = vrot.lane.b32.xlu0 %v860, 32
        %v1848 = vpop.permute.xlu0 %1847
        %1849 = vrot.lane.b32.xlu0 %v861, 32
        %v1850 = vpop.permute.xlu0 %1849
        %1851 = vrot.lane.b32.xlu0 %v862, 32
        %v1852 = vpop.permute.xlu0 %1851
        %1853 = vrot.lane.b32.xlu0 %v863, 32
        %v1854 = vpop.permute.xlu0 %1853
        %1855 = vrot.lane.b32.xlu0 %v864, 32
        %v1856 = vpop.permute.xlu0 %1855
        %v1889 = vsel %vm402, %v576, %v898
        %v1890 = vsel %vm402, %v577, %v900
        %v1891 = vsel %vm402, %v578, %v902
        %v1892 = vsel %vm402, %v579, %v904
        %v1893 = vsel %vm402, %v580, %v906
        %v1894 = vsel %vm402, %v581, %v908
        %v1895 = vsel %vm402, %v582, %v910
        %v1896 = vsel %vm402, %v583, %v912
        %v1897 = vsel %vm402, %v584, %v914
        %v1898 = vsel %vm402, %v585, %v916
        %v1899 = vsel %vm402, %v586, %v918
        %v1900 = vsel %vm402, %v587, %v920
        %v1901 = vsel %vm402, %v588, %v922
        %v1902 = vsel %vm402, %v589, %v924
        %v1903 = vsel %vm402, %v590, %v926
        %v1904 = vsel %vm402, %v591, %v928
        %v1905 = vsel %vm402, %v592, %v930
        %v1906 = vsel %vm402, %v593, %v932
        %v1907 = vsel %vm402, %v594, %v934
        %v1908 = vsel %vm402, %v595, %v936
        %v1909 = vsel %vm402, %v596, %v938
        %v1910 = vsel %vm402, %v597, %v940
        %v1911 = vsel %vm402, %v598, %v942
        %v1912 = vsel %vm402, %v599, %v944
        %v1913 = vsel %vm402, %v600, %v946
        %v1914 = vsel %vm402, %v601, %v948
        %v1915 = vsel %vm402, %v602, %v950
        %v1916 = vsel %vm402, %v603, %v952
        %v1917 = vsel %vm402, %v604, %v954
        %v1918 = vsel %vm402, %v605, %v956
        %v1919 = vsel %vm402, %v606, %v958
        %v1920 = vsel %vm402, %v607, %v960
        %vm1921 = vcmask 64512
        %v1922 = vsel %vm1921, %v1889, %v1026
        %v1923 = vsel %vm1921, %v1890, %v1028
        %v1924 = vsel %vm1921, %v1891, %v1030
        %v1925 = vsel %vm1921, %v1892, %v1032
        %v1926 = vsel %vm1921, %v1893, %v1034
        %v1927 = vsel %vm1921, %v1894, %v1036
        %v1928 = vsel %vm1921, %v1895, %v1038
        %v1929 = vsel %vm1921, %v1896, %v1040
        %v1930 = vsel %vm1921, %v1897, %v1042
        %v1931 = vsel %vm1921, %v1898, %v1044
        %v1932 = vsel %vm1921, %v1899, %v1046
        %v1933 = vsel %vm1921, %v1900, %v1048
        %v1934 = vsel %vm1921, %v1901, %v1050
        %v1935 = vsel %vm1921, %v1902, %v1052
        %v1936 = vsel %vm1921, %v1903, %v1054
        %v1937 = vsel %vm1921, %v1904, %v1056
        %v1938 = vsel %vm1921, %v1905, %v1058
        %v1939 = vsel %vm1921, %v1906, %v1060
        %v1940 = vsel %vm1921, %v1907, %v1062
        %v1941 = vsel %vm1921, %v1908, %v1064
        %v1942 = vsel %vm1921, %v1909, %v1066
        %v1943 = vsel %vm1921, %v1910, %v1068
        %v1944 = vsel %vm1921, %v1911, %v1070
        %v1945 = vsel %vm1921, %v1912, %v1072
        %v1946 = vsel %vm1921, %v1913, %v1074
        %v1947 = vsel %vm1921, %v1914, %v1076
        %v1948 = vsel %vm1921, %v1915, %v1078
        %v1949 = vsel %vm1921, %v1916, %v1080
        %v1950 = vsel %vm1921, %v1917, %v1082
        %v1951 = vsel %vm1921, %v1918, %v1084
        %v1952 = vsel %vm1921, %v1919, %v1086
        %v1953 = vsel %vm1921, %v1920, %v1088
        %vm1954 = vcmask 97280
        %v1955 = vsel %vm1954, %v1922, %v1154
        %v1956 = vsel %vm1954, %v1923, %v1156
        %v1957 = vsel %vm1954, %v1924, %v1158
        %v1958 = vsel %vm1954, %v1925, %v1160
        %v1959 = vsel %vm1954, %v1926, %v1162
        %v1960 = vsel %vm1954, %v1927, %v1164
        %v1961 = vsel %vm1954, %v1928, %v1166
        %v1962 = vsel %vm1954, %v1929, %v1168
        %v1963 = vsel %vm1954, %v1930, %v1170
        %v1964 = vsel %vm1954, %v1931, %v1172
        %v1965 = vsel %vm1954, %v1932, %v1174
        %v1966 = vsel %vm1954, %v1933, %v1176
        %v1967 = vsel %vm1954, %v1934, %v1178
        %v1968 = vsel %vm1954, %v1935, %v1180
        %v1969 = vsel %vm1954, %v1936, %v1182
        %v1970 = vsel %vm1954, %v1937, %v1184
        %v1971 = vsel %vm1954, %v1938, %v1186
        %v1972 = vsel %vm1954, %v1939, %v1188
        %v1973 = vsel %vm1954, %v1940, %v1190
        %v1974 = vsel %vm1954, %v1941, %v1192
        %v1975 = vsel %vm1954, %v1942, %v1194
        %v1976 = vsel %vm1954, %v1943, %v1196
        %v1977 = vsel %vm1954, %v1944, %v1198
        %v1978 = vsel %vm1954, %v1945, %v1200
        %v1979 = vsel %vm1954, %v1946, %v1202
        %v1980 = vsel %vm1954, %v1947, %v1204
        %v1981 = vsel %vm1954, %v1948, %v1206
        %v1982 = vsel %vm1954, %v1949, %v1208
        %v1983 = vsel %vm1954, %v1950, %v1210
        %v1984 = vsel %vm1954, %v1951, %v1212
        %v1985 = vsel %vm1954, %v1952, %v1214
        %v1986 = vsel %vm1954, %v1953, %v1216
        %vm1987 = vcmask 130048
        %v1988 = vsel %vm1987, %v1955, %v1282
        %v1989 = vsel %vm1987, %v1956, %v1284
        %v1990 = vsel %vm1987, %v1957, %v1286
        %v1991 = vsel %vm1987, %v1958, %v1288
        %v1992 = vsel %vm1987, %v1959, %v1290
        %v1993 = vsel %vm1987, %v1960, %v1292
        %v1994 = vsel %vm1987, %v1961, %v1294
        %v1995 = vsel %vm1987, %v1962, %v1296
        %v1996 = vsel %vm1987, %v1963, %v1298
        %v1997 = vsel %vm1987, %v1964, %v1300
        %v1998 = vsel %vm1987, %v1965, %v1302
        %v1999 = vsel %vm1987, %v1966, %v1304
        %v2000 = vsel %vm1987, %v1967, %v1306
        %v2001 = vsel %vm1987, %v1968, %v1308
        %v2002 = vsel %vm1987, %v1969, %v1310
        %v2003 = vsel %vm1987, %v1970, %v1312
        %v2004 = vsel %vm1987, %v1971, %v1314
        %v2005 = vsel %vm1987, %v1972, %v1316
        %v2006 = vsel %vm1987, %v1973, %v1318
        %v2007 = vsel %vm1987, %v1974, %v1320
        %v2008 = vsel %vm1987, %v1975, %v1322
        %v2009 = vsel %vm1987, %v1976, %v1324
        %v2010 = vsel %vm1987, %v1977, %v1326
        %v2011 = vsel %vm1987, %v1978, %v1328
        %v2012 = vsel %vm1987, %v1979, %v1330
        %v2013 = vsel %vm1987, %v1980, %v1332
        %v2014 = vsel %vm1987, %v1981, %v1334
        %v2015 = vsel %vm1987, %v1982, %v1336
        %v2016 = vsel %vm1987, %v1983, %v1338
        %v2017 = vsel %vm1987, %v1984, %v1340
        %v2018 = vsel %vm1987, %v1985, %v1342
        %v2019 = vsel %vm1987, %v1986, %v1344
        %vm2020 = vcmask 162816
        %v2021 = vsel %vm2020, %v1988, %v1410
        %v2022 = vsel %vm2020, %v1989, %v1412
        %v2023 = vsel %vm2020, %v1990, %v1414
        %v2024 = vsel %vm2020, %v1991, %v1416
        %v2025 = vsel %vm2020, %v1992, %v1418
        %v2026 = vsel %vm2020, %v1993, %v1420
        %v2027 = vsel %vm2020, %v1994, %v1422
        %v2028 = vsel %vm2020, %v1995, %v1424
        %v2029 = vsel %vm2020, %v1996, %v1426
        %v2030 = vsel %vm2020, %v1997, %v1428
        %v2031 = vsel %vm2020, %v1998, %v1430
        %v2032 = vsel %vm2020, %v1999, %v1432
        %v2033 = vsel %vm2020, %v2000, %v1434
        %v2034 = vsel %vm2020, %v2001, %v1436
        %v2035 = vsel %vm2020, %v2002, %v1438
        %v2036 = vsel %vm2020, %v2003, %v1440
        %v2037 = vsel %vm2020, %v2004, %v1442
        %v2038 = vsel %vm2020, %v2005, %v1444
        %v2039 = vsel %vm2020, %v2006, %v1446
        %v2040 = vsel %vm2020, %v2007, %v1448
        %v2041 = vsel %vm2020, %v2008, %v1450
        %v2042 = vsel %vm2020, %v2009, %v1452
        %v2043 = vsel %vm2020, %v2010, %v1454
        %v2044 = vsel %vm2020, %v2011, %v1456
        %v2045 = vsel %vm2020, %v2012, %v1458
        %v2046 = vsel %vm2020, %v2013, %v1460
        %v2047 = vsel %vm2020, %v2014, %v1462
        %v2048 = vsel %vm2020, %v2015, %v1464
        %v2049 = vsel %vm2020, %v2016, %v1466
        %v2050 = vsel %vm2020, %v2017, %v1468
        %v2051 = vsel %vm2020, %v2018, %v1470
        %v2052 = vsel %vm2020, %v2019, %v1472
        %vm2053 = vcmask 195584
        %v2054 = vsel %vm2053, %v2021, %v1538
        %v2055 = vsel %vm2053, %v2022, %v1540
        %v2056 = vsel %vm2053, %v2023, %v1542
        %v2057 = vsel %vm2053, %v2024, %v1544
        %v2058 = vsel %vm2053, %v2025, %v1546
        %v2059 = vsel %vm2053, %v2026, %v1548
        %v2060 = vsel %vm2053, %v2027, %v1550
        %v2061 = vsel %vm2053, %v2028, %v1552
        %v2062 = vsel %vm2053, %v2029, %v1554
        %v2063 = vsel %vm2053, %v2030, %v1556
        %v2064 = vsel %vm2053, %v2031, %v1558
        %v2065 = vsel %vm2053, %v2032, %v1560
        %v2066 = vsel %vm2053, %v2033, %v1562
        %v2067 = vsel %vm2053, %v2034, %v1564
        %v2068 = vsel %vm2053, %v2035, %v1566
        %v2069 = vsel %vm2053, %v2036, %v1568
        %v2070 = vsel %vm2053, %v2037, %v1570
        %v2071 = vsel %vm2053, %v2038, %v1572
        %v2072 = vsel %vm2053, %v2039, %v1574
        %v2073 = vsel %vm2053, %v2040, %v1576
        %v2074 = vsel %vm2053, %v2041, %v1578
        %v2075 = vsel %vm2053, %v2042, %v1580
        %v2076 = vsel %vm2053, %v2043, %v1582
        %v2077 = vsel %vm2053, %v2044, %v1584
        %v2078 = vsel %vm2053, %v2045, %v1586
        %v2079 = vsel %vm2053, %v2046, %v1588
        %v2080 = vsel %vm2053, %v2047, %v1590
        %v2081 = vsel %vm2053, %v2048, %v1592
        %v2082 = vsel %vm2053, %v2049, %v1594
        %v2083 = vsel %vm2053, %v2050, %v1596
        %v2084 = vsel %vm2053, %v2051, %v1598
        %v2085 = vsel %vm2053, %v2052, %v1600
        %vm2086 = vcmask 228352
        %v2087 = vsel %vm2086, %v2054, %v1666
        %v2088 = vsel %vm2086, %v2055, %v1668
        %v2089 = vsel %vm2086, %v2056, %v1670
        %v2090 = vsel %vm2086, %v2057, %v1672
        %v2091 = vsel %vm2086, %v2058, %v1674
        %v2092 = vsel %vm2086, %v2059, %v1676
        %v2093 = vsel %vm2086, %v2060, %v1678
        %v2094 = vsel %vm2086, %v2061, %v1680
        %v2095 = vsel %vm2086, %v2062, %v1682
        %v2096 = vsel %vm2086, %v2063, %v1684
        %v2097 = vsel %vm2086, %v2064, %v1686
        %v2098 = vsel %vm2086, %v2065, %v1688
        %v2099 = vsel %vm2086, %v2066, %v1690
        %v2100 = vsel %vm2086, %v2067, %v1692
        %v2101 = vsel %vm2086, %v2068, %v1694
        %v2102 = vsel %vm2086, %v2069, %v1696
        %v2103 = vsel %vm2086, %v2070, %v1698
        %v2104 = vsel %vm2086, %v2071, %v1700
        %v2105 = vsel %vm2086, %v2072, %v1702
        %v2106 = vsel %vm2086, %v2073, %v1704
        %v2107 = vsel %vm2086, %v2074, %v1706
        %v2108 = vsel %vm2086, %v2075, %v1708
        %v2109 = vsel %vm2086, %v2076, %v1710
        %v2110 = vsel %vm2086, %v2077, %v1712
        %v2111 = vsel %vm2086, %v2078, %v1714
        %v2112 = vsel %vm2086, %v2079, %v1716
        %v2113 = vsel %vm2086, %v2080, %v1718
        %v2114 = vsel %vm2086, %v2081, %v1720
        %v2115 = vsel %vm2086, %v2082, %v1722
        %v2116 = vsel %vm2086, %v2083, %v1724
        %v2117 = vsel %vm2086, %v2084, %v1726
        %v2118 = vsel %vm2086, %v2085, %v1728
        %vm2119 = vcmask 261120
        %v2120 = vsel %vm2119, %v2087, %v1794
        %v2121 = vsel %vm2119, %v2088, %v1796
        %v2122 = vsel %vm2119, %v2089, %v1798
        %v2123 = vsel %vm2119, %v2090, %v1800
        %v2124 = vsel %vm2119, %v2091, %v1802
        %v2125 = vsel %vm2119, %v2092, %v1804
        %v2126 = vsel %vm2119, %v2093, %v1806
        %v2127 = vsel %vm2119, %v2094, %v1808
        %v2128 = vsel %vm2119, %v2095, %v1810
        %v2129 = vsel %vm2119, %v2096, %v1812
        %v2130 = vsel %vm2119, %v2097, %v1814
        %v2131 = vsel %vm2119, %v2098, %v1816
        %v2132 = vsel %vm2119, %v2099, %v1818
        %v2133 = vsel %vm2119, %v2100, %v1820
        %v2134 = vsel %vm2119, %v2101, %v1822
        %v2135 = vsel %vm2119, %v2102, %v1824
        %v2136 = vsel %vm2119, %v2103, %v1826
        %v2137 = vsel %vm2119, %v2104, %v1828
        %v2138 = vsel %vm2119, %v2105, %v1830
        %v2139 = vsel %vm2119, %v2106, %v1832
        %v2140 = vsel %vm2119, %v2107, %v1834
        %v2141 = vsel %vm2119, %v2108, %v1836
        %v2142 = vsel %vm2119, %v2109, %v1838
        %v2143 = vsel %vm2119, %v2110, %v1840
        %v2144 = vsel %vm2119, %v2111, %v1842
        %v2145 = vsel %vm2119, %v2112, %v1844
        %v2146 = vsel %vm2119, %v2113, %v1846
        %v2147 = vsel %vm2119, %v2114, %v1848
        %v2148 = vsel %vm2119, %v2115, %v1850
        %v2149 = vsel %vm2119, %v2116, %v1852
        %v2150 = vsel %vm2119, %v2117, %v1854
        %v2151 = vsel %vm2119, %v2118, %v1856
        %v2152 = vld [vmem:[%s4] sm:$0xff]
        %v2153 = vld [vmem:[%s4 + $0x8] sm:$0xff]
        %v2154 = vld [vmem:[%s4 + $0x10] sm:$0xff]
        %v2155 = vld [vmem:[%s4 + $0x18] sm:$0xff]
        %v2156 = vld [vmem:[%s4 + $0x20] sm:$0xf]
        %v2158 = vlaneseq
        %v2159 = vshrl.u32 %v2158, 7
        %v2160 = vsub.s32 0, %v2159
        %v2161 = vrot.slane %v401, %v2160
        %vm2163 = vcmask 293888
        %v2165 = vsel %vm2163, %v2120, 0
        %v2168 = vsel %vm2163, %v2121, 0
        %v2171 = vsel %vm2163, %v2122, 0
        %v2174 = vsel %vm2163, %v2123, 0
        %v2177 = vsel %vm2163, %v2124, 0
        %v2180 = vsel %vm2163, %v2125, 0
        %v2183 = vsel %vm2163, %v2126, 0
        %v2186 = vsel %vm2163, %v2127, 0
        %v2189 = vsel %vm2163, %v2128, 0
        %v2192 = vsel %vm2163, %v2129, 0
        %v2195 = vsel %vm2163, %v2130, 0
        %v2198 = vsel %vm2163, %v2131, 0
        %v2201 = vsel %vm2163, %v2132, 0
        %v2204 = vsel %vm2163, %v2133, 0
        %v2207 = vsel %vm2163, %v2134, 0
        %v2210 = vsel %vm2163, %v2135, 0
        %v2213 = vsel %vm2163, %v2136, 0
        %v2216 = vsel %vm2163, %v2137, 0
        %v2219 = vsel %vm2163, %v2138, 0
        %v2222 = vsel %vm2163, %v2139, 0
        %v2225 = vsel %vm2163, %v2140, 0
        %v2228 = vsel %vm2163, %v2141, 0
        %v2231 = vsel %vm2163, %v2142, 0
        %v2234 = vsel %vm2163, %v2143, 0
        %v2237 = vsel %vm2163, %v2144, 0
        %v2240 = vsel %vm2163, %v2145, 0
        %v2243 = vsel %vm2163, %v2146, 0
        %v2246 = vsel %vm2163, %v2147, 0
        %v2249 = vsel %vm2163, %v2148, 0
        %v2252 = vsel %vm2163, %v2149, 0
        %v2255 = vsel %vm2163, %v2150, 0
        %v2258 = vsel %vm2163, %v2151, 0
        %v2261 = vsel %vm257, %v2156, 0
        %2263 = vmatprep.subr.mxu0 0.0
        %2264 = vmatpush1.msra.mxu0 %v2152
        %2265 = vmatprep.subr.mxu0 0.0
        %2266 = vmatpush1.msra.mxu0 %v2153
        %2267 = vmatprep.subr.mxu0 0.0
        %2268 = vmatpush1.msra.mxu0 %v2154
        %2269 = vmatprep.subr.mxu0 0.0
        %2270 = vmatpush1.msra.mxu0 %v2155
        %2271 = vmatprep.subr.mxu0 0.0
        %2272 = vmatpush1.msra.mxu0 %v2261
        %2273 = vmatprep.subr.mxu0 0.0
        %2274 = vmatpush1.msra.mxu0 0.0
        %2275 = vmatprep.subr.mxu0 0.0
        %2276 = vmatpush1.msra.mxu0 0.0
        %2277 = vmatprep.subr.mxu0 0.0
        %2278 = vmatpush1.msra.mxu0 0.0
        %2279 = vmatprep.subr.mxu0 0.0
        %2280 = vmatpush1.msra.mxu0 0.0
        %2281 = vmatprep.subr.mxu0 0.0
        %2282 = vmatpush1.msra.mxu0 0.0
        %2283 = vmatprep.subr.mxu0 0.0
        %2284 = vmatpush1.msra.mxu0 0.0
        %2285 = vmatprep.subr.mxu0 0.0
        %2286 = vmatpush1.msra.mxu0 0.0
        %2287 = vmatprep.subr.mxu0 0.0
        %2288 = vmatpush1.msra.mxu0 0.0
        %2289 = vmatprep.subr.mxu0 0.0
        %2290 = vmatpush1.msra.mxu0 0.0
        %2291 = vmatprep.subr.mxu0 0.0
        %2292 = vmatpush1.msra.mxu0 0.0
        %2293 = vmatprep.subr.mxu0 0.0
        %2294 = vmatpush1.msra.mxu0 0.0
        %2295 = vmatprep.subr.mxu0 0.0
        %2296 = vmatpush1.msra.mxu0 0.0
        %2297 = vmatprep.subr.mxu0 0.0
        %2298 = vmatpush1.msra.mxu0 0.0
        %2299 = vmatprep.subr.mxu0 0.0
        %2300 = vmatpush1.msra.mxu0 0.0
        %2301 = vmatprep.subr.mxu0 0.0
        %2302 = vmatpush1.msra.mxu0 0.0
        %2303 = vmatprep.subr.mxu0 0.0
        %2304 = vmatpush1.msra.mxu0 0.0
        %2305 = vmatprep.subr.mxu0 0.0
        %2306 = vmatpush1.msra.mxu0 0.0
        %2307 = vmatprep.subr.mxu0 0.0
        %2308 = vmatpush1.msra.mxu0 0.0
        %2309 = vmatprep.subr.mxu0 0.0
        %2310 = vmatpush1.msra.mxu0 0.0
        %2311 = vmatprep.subr.mxu0 0.0
        %2312 = vmatpush1.msra.mxu0 0.0
        %2313 = vmatprep.subr.mxu0 0.0
        %2314 = vmatpush1.msra.mxu0 0.0
        %2315 = vmatprep.subr.mxu0 0.0
        %2316 = vmatpush1.msra.mxu0 0.0
        %2317 = vmatprep.subr.mxu0 0.0
        %2318 = vmatpush1.msra.mxu0 0.0
        %2319 = vmatprep.subr.mxu0 0.0
        %2320 = vmatpush1.msra.mxu0 0.0
        %2321 = vmatprep.subr.mxu0 0.0
        %2322 = vmatpush1.msra.mxu0 0.0
        %2323 = vmatprep.subr.mxu0 0.0
        %2324 = vmatpush1.msra.mxu0 0.0
        %2325 = vmatprep.subr.mxu0 0.0
        %2326 = vmatpush1.msra.mxu0 0.0
        %2327 = vmatprep.mubr.f32.mxu0 0.0
        %2328 = vmatmul.mubr.f32.gmra.mrb[0].mxu0 %v2165
        %v2329 = vpop.f32.mrb[0].mxu0
        %v2330 = vadd.f32 %v2161, %v2329
        %v2331 = vpop.f32.mrb[0].mxu0
        %2332 = vmatprep.mubr.f32.mxu0 0.0
        %2333 = vmatmul.mubr.f32.gmra.mrb[0].mxu0 %v2168
        %v2334 = vpop.f32.mrb[0].mxu0
        %v2335 = vadd.f32 %v2161, %v2334
        %v2336 = vpop.f32.mrb[0].mxu0
        %2337 = vmatprep.mubr.f32.mxu0 0.0
        %2338 = vmatmul.mubr.f32.gmra.mrb[0].mxu0 %v2171
        %v2339 = vpop.f32.mrb[0].mxu0
        %v2340 = vadd.f32 %v2161, %v2339
        %v2341 = vpop.f32.mrb[0].mxu0
        %2342 = vmatprep.mubr.f32.mxu0 0.0
        %2343 = vmatmul.mubr.f32.gmra.mrb[0].mxu0 %v2174
        %v2344 = vpop.f32.mrb[0].mxu0
        %v2345 = vadd.f32 %v2161, %v2344
        %v2346 = vpop.f32.mrb[0].mxu0
        %2347 = vmatprep.mubr.f32.mxu0 0.0
        %2348 = vmatmul.mubr.f32.gmra.mrb[0].mxu0 %v2177
        %v2349 = vpop.f32.mrb[0].mxu0
        %v2350 = vadd.f32 %v2161, %v2349
        %v2351 = vpop.f32.mrb[0].mxu0
        %2352 = vmatprep.mubr.f32.mxu0 0.0
        %2353 = vmatmul.mubr.f32.gmra.mrb[0].mxu0 %v2180
        %v2354 = vpop.f32.mrb[0].mxu0
        %v2355 = vadd.f32 %v2161, %v2354
        %v2356 = vpop.f32.mrb[0].mxu0
        %2357 = vmatprep.mubr.f32.mxu0 0.0
        %2358 = vmatmul.mubr.f32.gmra.mrb[0].mxu0 %v2183
        %v2359 = vpop.f32.mrb[0].mxu0
        %v2360 = vadd.f32 %v2161, %v2359
        %v2361 = vpop.f32.mrb[0].mxu0
        %2362 = vmatprep.mubr.f32.mxu0 0.0
        %2363 = vmatmul.mubr.f32.gmra.mrb[0].mxu0 %v2186
        %v2364 = vpop.f32.mrb[0].mxu0
        %v2365 = vadd.f32 %v2161, %v2364
        %v2366 = vpop.f32.mrb[0].mxu0
        %2367 = vmatprep.mubr.f32.mxu0 0.0
        %2368 = vmatmul.mubr.f32.gmra.mrb[0].mxu0 %v2189
        %v2369 = vpop.f32.mrb[0].mxu0
        %v2370 = vadd.f32 %v2161, %v2369
        %v2371 = vpop.f32.mrb[0].mxu0
        %2372 = vmatprep.mubr.f32.mxu0 0.0
        %2373 = vmatmul.mubr.f32.gmra.mrb[0].mxu0 %v2192
        %v2374 = vpop.f32.mrb[0].mxu0
        %v2375 = vadd.f32 %v2161, %v2374
        %v2376 = vpop.f32.mrb[0].mxu0
        %2377 = vmatprep.mubr.f32.mxu0 0.0
        %2378 = vmatmul.mubr.f32.gmra.mrb[0].mxu0 %v2195
        %v2379 = vpop.f32.mrb[0].mxu0
        %v2380 = vadd.f32 %v2161, %v2379
        %v2381 = vpop.f32.mrb[0].mxu0
        %2382 = vmatprep.mubr.f32.mxu0 0.0
        %2383 = vmatmul.mubr.f32.gmra.mrb[0].mxu0 %v2198
        %v2384 = vpop.f32.mrb[0].mxu0
        %v2385 = vadd.f32 %v2161, %v2384
        %v2386 = vpop.f32.mrb[0].mxu0
        %2387 = vmatprep.mubr.f32.mxu0 0.0
        %2388 = vmatmul.mubr.f32.gmra.mrb[0].mxu0 %v2201
        %v2389 = vpop.f32.mrb[0].mxu0
        %v2390 = vadd.f32 %v2161, %v2389
        %v2391 = vpop.f32.mrb[0].mxu0
        %2392 = vmatprep.mubr.f32.mxu0 0.0
        %2393 = vmatmul.mubr.f32.gmra.mrb[0].mxu0 %v2204
        %v2394 = vpop.f32.mrb[0].mxu0
        %v2395 = vadd.f32 %v2161, %v2394
        %v2396 = vpop.f32.mrb[0].mxu0
        %2397 = vmatprep.mubr.f32.mxu0 0.0
        %2398 = vmatmul.mubr.f32.gmra.mrb[0].mxu0 %v2207
        %v2399 = vpop.f32.mrb[0].mxu0
        %v2400 = vadd.f32 %v2161, %v2399
        %v2401 = vpop.f32.mrb[0].mxu0
        %2402 = vmatprep.mubr.f32.mxu0 0.0
        %2403 = vmatmul.mubr.f32.gmra.mrb[0].mxu0 %v2210
        %v2404 = vpop.f32.mrb[0].mxu0
        %v2405 = vadd.f32 %v2161, %v2404
        %v2406 = vpop.f32.mrb[0].mxu0
        %2407 = vmatprep.mubr.f32.mxu0 0.0
        %2408 = vmatmul.mubr.f32.gmra.mrb[0].mxu0 %v2213
        %v2409 = vpop.f32.mrb[0].mxu0
        %v2410 = vadd.f32 %v2161, %v2409
        %v2411 = vpop.f32.mrb[0].mxu0
        %2412 = vmatprep.mubr.f32.mxu0 0.0
        %2413 = vmatmul.mubr.f32.gmra.mrb[0].mxu0 %v2216
        %v2414 = vpop.f32.mrb[0].mxu0
        %v2415 = vadd.f32 %v2161, %v2414
        %v2416 = vpop.f32.mrb[0].mxu0
        %2417 = vmatprep.mubr.f32.mxu0 0.0
        %2418 = vmatmul.mubr.f32.gmra.mrb[0].mxu0 %v2219
        %v2419 = vpop.f32.mrb[0].mxu0
        %v2420 = vadd.f32 %v2161, %v2419
        %v2421 = vpop.f32.mrb[0].mxu0
        %2422 = vmatprep.mubr.f32.mxu0 0.0
        %2423 = vmatmul.mubr.f32.gmra.mrb[0].mxu0 %v2222
        %v2424 = vpop.f32.mrb[0].mxu0
        %v2425 = vadd.f32 %v2161, %v2424
        %v2426 = vpop.f32.mrb[0].mxu0
        %2427 = vmatprep.mubr.f32.mxu0 0.0
        %2428 = vmatmul.mubr.f32.gmra.mrb[0].mxu0 %v2225
        %v2429 = vpop.f32.mrb[0].mxu0
        %v2430 = vadd.f32 %v2161, %v2429
        %v2431 = vpop.f32.mrb[0].mxu0
        %2432 = vmatprep.mubr.f32.mxu0 0.0
        %2433 = vmatmul.mubr.f32.gmra.mrb[0].mxu0 %v2228
        %v2434 = vpop.f32.mrb[0].mxu0
        %v2435 = vadd.f32 %v2161, %v2434
        %v2436 = vpop.f32.mrb[0].mxu0
        %2437 = vmatprep.mubr.f32.mxu0 0.0
        %2438 = vmatmul.mubr.f32.gmra.mrb[0].mxu0 %v2231
        %v2439 = vpop.f32.mrb[0].mxu0
        %v2440 = vadd.f32 %v2161, %v2439
        %v2441 = vpop.f32.mrb[0].mxu0
        %2442 = vmatprep.mubr.f32.mxu0 0.0
        %2443 = vmatmul.mubr.f32.gmra.mrb[0].mxu0 %v2234
        %v2444 = vpop.f32.mrb[0].mxu0
        %v2445 = vadd.f32 %v2161, %v2444
        %v2446 = vpop.f32.mrb[0].mxu0
        %2447 = vmatprep.mubr.f32.mxu0 0.0
        %2448 = vmatmul.mubr.f32.gmra.mrb[0].mxu0 %v2237
        %v2449 = vpop.f32.mrb[0].mxu0
        %v2450 = vadd.f32 %v2161, %v2449
        %v2451 = vpop.f32.mrb[0].mxu0
        %2452 = vmatprep.mubr.f32.mxu0 0.0
        %2453 = vmatmul.mubr.f32.gmra.mrb[0].mxu0 %v2240
        %v2454 = vpop.f32.mrb[0].mxu0
        %v2455 = vadd.f32 %v2161, %v2454
        %v2456 = vpop.f32.mrb[0].mxu0
        %2457 = vmatprep.mubr.f32.mxu0 0.0
        %2458 = vmatmul.mubr.f32.gmra.mrb[0].mxu0 %v2243
        %v2459 = vpop.f32.mrb[0].mxu0
        %v2460 = vadd.f32 %v2161, %v2459
        %v2461 = vpop.f32.mrb[0].mxu0
        %2462 = vmatprep.mubr.f32.mxu0 0.0
        %2463 = vmatmul.mubr.f32.gmra.mrb[0].mxu0 %v2246
        %v2464 = vpop.f32.mrb[0].mxu0
        %v2465 = vadd.f32 %v2161, %v2464
        %v2466 = vpop.f32.mrb[0].mxu0
        %2467 = vmatprep.mubr.f32.mxu0 0.0
        %2468 = vmatmul.mubr.f32.gmra.mrb[0].mxu0 %v2249
        %v2469 = vpop.f32.mrb[0].mxu0
        %v2470 = vadd.f32 %v2161, %v2469
        %v2471 = vpop.f32.mrb[0].mxu0
        %2472 = vmatprep.mubr.f32.mxu0 0.0
        %2473 = vmatmul.mubr.f32.gmra.mrb[0].mxu0 %v2252
        %v2474 = vpop.f32.mrb[0].mxu0
        %v2475 = vadd.f32 %v2161, %v2474
        %v2476 = vpop.f32.mrb[0].mxu0
        %2477 = vmatprep.mubr.f32.mxu0 0.0
        %2478 = vmatmul.mubr.f32.gmra.mrb[0].mxu0 %v2255
        %v2479 = vpop.f32.mrb[0].mxu0
        %v2480 = vadd.f32 %v2161, %v2479
        %v2481 = vpop.f32.mrb[0].mxu0
        %2482 = vmatprep.mubr.f32.mxu0 0.0
        %2483 = vmatmul.mubr.f32.gmra.mrb[0].mxu0 %v2258
        %v2484 = vpop.f32.mrb[0].mxu0
        %v2485 = vadd.f32 %v2161, %v2484
        %v2486 = vpop.f32.mrb[0].mxu0
        %2487 = vdwg.mxu0
        %2488 = vxpose.xlu0.b32.start [1/16] %v2330, 128
        %2489 = vxpose.xlu0.b32.cont [2/16] %v2335, 128
        %2490 = vxpose.xlu0.b32.cont [3/16] %v2340, 128
        %2491 = vxpose.xlu0.b32.cont [4/16] %v2345, 128
        %2492 = vxpose.xlu0.b32.cont [5/16] %v2350, 128
        %2493 = vxpose.xlu0.b32.cont [6/16] %v2355, 128
        %2494 = vxpose.xlu0.b32.cont [7/16] %v2360, 128
        %2495 = vxpose.xlu0.b32.cont [8/16] %v2365, 128
        %2496 = vxpose.xlu0.b32.cont [9/16] %v2370, 128
        %2497 = vxpose.xlu0.b32.cont [10/16] %v2375, 128
        %2498 = vxpose.xlu0.b32.cont [11/16] %v2380, 128
        %2499 = vxpose.xlu0.b32.cont [12/16] %v2385, 128
        %2500 = vxpose.xlu0.b32.cont [13/16] %v2390, 128
        %2501 = vxpose.xlu0.b32.cont [14/16] %v2395, 128
        %2502 = vxpose.xlu0.b32.cont [15/16] %v2400, 128
        %2503 = vxpose.xlu0.b32.end [16/16] %v2405, 128
        %v2504 = vpop.trf.xlu0
        %v2505 = vpop.trf.xlu0
        %v2506 = vpop.trf.xlu0
        %v2507 = vpop.trf.xlu0
        %v2508 = vpop.trf.xlu0
        %v2509 = vpop.trf.xlu0
        %v2510 = vpop.trf.xlu0
        %v2511 = vpop.trf.xlu0
        %v2512 = vpop.trf.xlu0
        %v2513 = vpop.trf.xlu0
        %v2514 = vpop.trf.xlu0
        %v2515 = vpop.trf.xlu0
        %v2516 = vpop.trf.xlu0
        %v2517 = vpop.trf.xlu0
        %v2518 = vpop.trf.xlu0
        %v2519 = vpop.trf.xlu0
        %2520 = vxpose.xlu0.b32.start [1/16] %v2410, 128
        %2521 = vxpose.xlu0.b32.cont [2/16] %v2415, 128
        %2522 = vxpose.xlu0.b32.cont [3/16] %v2420, 128
        %2523 = vxpose.xlu0.b32.cont [4/16] %v2425, 128
        %2524 = vxpose.xlu0.b32.cont [5/16] %v2430, 128
        %2525 = vxpose.xlu0.b32.cont [6/16] %v2435, 128
        %2526 = vxpose.xlu0.b32.cont [7/16] %v2440, 128
        %2527 = vxpose.xlu0.b32.cont [8/16] %v2445, 128
        %2528 = vxpose.xlu0.b32.cont [9/16] %v2450, 128
        %2529 = vxpose.xlu0.b32.cont [10/16] %v2455, 128
        %2530 = vxpose.xlu0.b32.cont [11/16] %v2460, 128
        %2531 = vxpose.xlu0.b32.cont [12/16] %v2465, 128
        %2532 = vxpose.xlu0.b32.cont [13/16] %v2470, 128
        %2533 = vxpose.xlu0.b32.cont [14/16] %v2475, 128
        %2534 = vxpose.xlu0.b32.cont [15/16] %v2480, 128
        %2535 = vxpose.xlu0.b32.end [16/16] %v2485, 128
        %v2536 = vpop.trf.xlu0
        %v2537 = vpop.trf.xlu0
        %v2538 = vpop.trf.xlu0
        %v2539 = vpop.trf.xlu0
        %v2540 = vpop.trf.xlu0
        %v2541 = vpop.trf.xlu0
        %v2542 = vpop.trf.xlu0
        %v2543 = vpop.trf.xlu0
        %v2544 = vpop.trf.xlu0
        %v2545 = vpop.trf.xlu0
        %v2546 = vpop.trf.xlu0
        %v2547 = vpop.trf.xlu0
        %v2548 = vpop.trf.xlu0
        %v2549 = vpop.trf.xlu0
        %v2550 = vpop.trf.xlu0
        %v2551 = vpop.trf.xlu0
        %2552 = vst [vmem:[%s244] sm:$0xff] %v2504
        %2553 = vst [vmem:[%s244 + $0x8] sm:$0xff] %v2536
        %s2554 = sand.u32 %s159, 1
        %s2555 = scalar_lea.sflag [#allocation4], %s2554
        %s2556 = sand.u32 %s159, 1
        %s2557 = smul.addr %s2556, 16
        %s2558 = scalar_lea.vmem [#allocation3], %s2557
        // Predicated region
        $region45: #{tpu_custom_call.1} parent=43 // pred_check
          %p2559 = pneg %p169
        $region46: #{tpu_custom_call.1} parent=43 // pred_check_branch
          %2561 = sbr.rel (%p2559) target = $region48
        $region47: #{tpu_custom_call.1} parent=43 // pred_region
          %s2563 = ssub.s32 256, 256
          %2564 = vsyncadd %s2555, %s2563
          %s2565 = smul.addr %s20, 2
          %s2566 = smul.addr %s2565, 128
          %s2567 = scalar_lea.hbm %s6, %s2566
          %s2569 = sshll.u32 %s2558, 4
          %s2570 = int_to_ptr.vmem [resolvable:$true] %s2569
          %2572 = dma.vmem_to_hbm [thread:$0]  %s2570, 256, %s2567, %s2555
        $region48: #{tpu_custom_call.1} parent=43 // pred_fallthru
          _
      $region44: #{tpu_custom_call.1} parent=5 // pred_fallthru
        _
      %p2573 = scmp.le.s32.totalorder 2, %s15
      // Predicated region
      $region49: #{tpu_custom_call.1} parent=5 // pred_check
        %p2574 = pneg %p2573
      $region50: #{tpu_custom_call.1} parent=5 // pred_check_branch
        %2576 = sbr.rel (%p2574) target = $region52
      $region51: #{tpu_custom_call.1} parent=5 // pred_region
        %s2577 = ssub.s32 %s15, 2
        // Predicated region
        $region53: #{tpu_custom_call.1} parent=51 // pred_check
          %p2578 = pneg %p175
        $region54: #{tpu_custom_call.1} parent=51 // pred_check_branch
          %2580 = sbr.rel (%p2578) target = $region56
        $region55: #{tpu_custom_call.1} parent=51 // pred_region
          %s2581 = sand.u32 %s160, 1
          %s2582 = scalar_lea.sflag [#allocation4], %s2581
          %s2583 = sand.u32 %s160, 1
          %s2584 = smul.addr %s2583, 16
          %s2585 = scalar_lea.vmem [#allocation3], %s2584
          %2586 = dma.done %s2582, 256
        $region56: #{tpu_custom_call.1} parent=51 // pred_fallthru
          _
      $region52: #{tpu_custom_call.1} parent=5 // pred_fallthru
        _
    $region6: #{tpu_custom_call.1} parent=1 // loop_footer
      %s19 = sadd.s32 1, %s15
    $region7: #{tpu_custom_call.1} parent=1 // loop_footer_branch
      %14 = sbr.rel target = $region3
    $region8: #{tpu_custom_call.1} parent=1 // loop_exit
      _
    %2587 = vsyncpa [#allocation4], 1
    %s2588 = scalar_lea.sflag [#allocation4], 1
    %2589 = vsyncpa %s2588, 1

</llo_original>
